<compile_context>
chip_gen: v7x
topology: tpu7x:2x2x1
jax: 0.10.0
libtpu: 0.0.40
codegen_flags: <defaults>
</compile_context>

<pallas_src>
import jax
import jax.numpy as jnp
from jax import lax
from jax.experimental import pallas as pl
from jax.experimental.pallas import tpu as pltpu

BN_EPS = 1e-5

# v6e/v7x: set True to also run the theta/phi score matmul with bf16 MXU
# operands (~2x MXU throughput, halves operand VMEM).  Kept False by default so
# the exp() amplification of bf16 score error stays inside the 1e-2 validation
# tolerance on all shapes.
SCORES_IN_BF16 = False


# --------------------------------------------------------------------------
# Block-size helpers (sized against VMEM; explicit vmem_limit_bytes is set so
# v5e's 16 MiB / v7x's 32 MiB scoped defaults don't silently bite).
# --------------------------------------------------------------------------
def _largest_divisor_at_most(n, k):
    k = int(max(1, min(n, k)))
    for d in range(k, 0, -1):
        if n % d == 0:
            return d
    return 1


def _pick_inter_batch_tile(b, per_batch_bytes, target_bytes=2 << 20):
    # Batch several images per grid step so each DMA tile is ~0.5-2 MB instead
    # of a few KB (amortizes ~0.35 us/step overhead).  Kernel 1 is fully
    # vectorized over the tile, so no unroll cap is needed.
    want = max(1, target_bytes // max(per_batch_bytes, 1))
    return _largest_divisor_at_most(b, want)


def _pick_nonlocal_batch_tile(b, per_batch_bytes, target_bytes=1 << 20):
    # Cap at 8 (per-batch work is unrolled inside the kernel) and keep >= 2
    # grid steps when possible so both v7x TensorCores get work.
    want = max(1, min(8, target_bytes // max(per_batch_bytes, 1)))
    bt = _largest_divisor_at_most(b, want)
    while bt > 1 and b // bt < 2:
        bt = _largest_divisor_at_most(b, bt - 1)
    return bt


def _pick_key_tile(S, max_score_bytes=1 << 20):
    # Flash-style key tiling: keep the (kt, S) f32 score tile bounded so the
    # attention fits v7x's 64 MiB VMEM (and v5e's 16 MiB scoped default) for
    # large feature maps; kt must divide S.
    if S * S * 4 <= max_score_bytes:
        return S
    kt = max(128, (max_score_bytes // (S * 4)) // 128 * 128)
    while kt > 128 and S % kt != 0:
        kt -= 128
    if S % kt != 0:
        # TODO(synk): pad ragged key tiles instead of falling back to full S.
        return S
    return kt


def _vmem_limit(est_bytes):
    # Generous headroom, clamped to v7x physical VMEM.
    return int(min(max(2 * est_bytes, 16 << 20), 64 << 20))


# --------------------------------------------------------------------------
# Kernel 1: Inter_channel front end.
# For each (batch, channel): depthwise conv (h,1) -> (1,w) row, depthwise conv
# (1,w) -> (h,1) column (both + folded BN + ReLU), then
# torch.mm((1,w),(h,1)) == sum_i row[i]*col[i]  (requires h == w).
# --------------------------------------------------------------------------
def _inter_dot_kernel(x_ref, w1_ref, w2_ref, p_ref, out_ref):
    # x_ref: (bt, c, h, w)   w1_ref: (c, h)   w2_ref: (c, w)
    # p_ref: (c, 4) columns = [bn1_scale, bn1_shift, bn2_scale, bn2_shift]
    # out_ref: (1, bt, c)  -- lane-dense along c, no trailing size-1 dim.
    x = x_ref[...]                                   # (bt, c, h, w)
    w1 = w1_ref[...][None, :, :, None]               # (1, c, h, 1)
    w2 = w2_ref[...][None, :, None, :]               # (1, c, 1, w)
    p = p_ref[...]
    s1 = p[:, 0:1][None]                             # (1, c, 1)
    t1 = p[:, 1:2][None]
    s2 = p[:, 2:3][None]
    t2 = p[:, 3:4][None]

    xl1 = jnp.sum(x * w1, axis=2)                    # (bt, c, w): conv (h,1), no pad
    xl1 = jnp.maximum(xl1 * s1 + t1, 0.0)            # folded BN + ReLU
    xl2 = jnp.sum(x * w2, axis=3)                    # (bt, c, h): conv (1,w), no pad
    xl2 = jnp.maximum(xl2 * s2 + t2, 0.0)            # folded BN + ReLU

    # torch.mm((1,w),(h,1)) with h == w -> one scalar per (batch, channel)
    out_ref[0] = jnp.sum(xl1 * xl2, axis=2)          # (bt, c)


def inter_dot(x, w1, w2, p1):
    b, c, h, w = x.shape
    per_batch = c * h * w * 4
    bt = _pick_inter_batch_tile(b, per_batch)
    n_tiles = b // bt
    est = 2 * bt * per_batch + 2 * bt * c * 4 + (2 << 20)

    out = pl.pallas_call(
        _inter_dot_kernel,
        out_shape=jax.ShapeDtypeStruct((n_tiles, bt, c), jnp.float32),
        grid=(n_tiles,),
        in_specs=[
            pl.BlockSpec((bt, c, h, w), lambda i: (i, 0, 0, 0)),
            pl.BlockSpec((c, h), lambda i: (0, 0)),
            pl.BlockSpec((c, w), lambda i: (0, 0)),
            pl.BlockSpec((c, 4), lambda i: (0, 0)),
        ],
        out_specs=pl.BlockSpec((1, bt, c), lambda i: (i, 0, 0)),
        compiler_params=pltpu.CompilerParams(
            dimension_semantics=("parallel",),
            vmem_limit_bytes=_vmem_limit(est),
        ),
    )(x, w1, w2, p1)
    return out.reshape(b, c)                         # (b, c)


# --------------------------------------------------------------------------
# Kernel 3: fused per-batch gate multiply (Inter_channel output) +
# Intra_channel non-local block + residual + final add.
# --------------------------------------------------------------------------
def _make_nonlocal_kernel(bt, c, S, kt, scores_bf16):
    n_kt = S // kt

    def kernel(x_ref, gate_ref, p_ref, out_ref):
        # x_ref: (bt, c, S)  gate_ref: (bt, c, 1)
        # p_ref: (c, 8) columns = [wg, bg, wt, bt, wp, bp, A, B]
        #        (A, B = W 1x1-dw conv + BN folded)
        p = p_ref[...]
        wg = p[:, 0:1]
        bg = p[:, 1:2]
        wth = p[:, 2:3]
        bth = p[:, 3:4]
        wph = p[:, 4:5]
        bph = p[:, 5:6]
        A = p[:, 6:7]
        B = p[:, 7:8]

        for bi in range(bt):                         # static unroll (bt <= 8)
            x = x_ref[bi]                            # (c, S)
            gate = gate_ref[bi]                      # (c, 1)
            th = x * wth + bth                       # theta(x), queries (c, S)
            th_mm = th.astype(jnp.bfloat16) if scores_bf16 else th

            # Online (flash-style) softmax over key tiles.  Scores are laid
            # out (key, query) so m/l/alpha are lane-dense (1, S) and both
            # matmuls are transpose-free.
            m = jnp.full((1, S), -jnp.inf, dtype=jnp.float32)
            l = jnp.zeros((1, S), dtype=jnp.float32)
            acc = jnp.zeros((c, S), dtype=jnp.float32)

            for t in range(n_kt):                    # static key-tile loop
                x_k = x[:, t * kt:(t + 1) * kt]      # (c, kt)
                ph_t = x_k * wph + bph               # phi(x) key tile
                g_t = x_k * wg + bg                  # g(x)   key tile
                ph_mm = ph_t.astype(jnp.bfloat16) if scores_bf16 else ph_t

                # s_t[k, q] = sum_c phi[c, k] * theta[c, q]
                s_t = lax.dot_general(
                    ph_mm, th_mm, (((0,), (0,)), ((), ())),
                    preferred_element_type=jnp.float32)           # (kt, S)
                m_t = jnp.max(s_t, axis=0, keepdims=True)         # (1, S)
                m_new = jnp.maximum(m, m_t)
                prob = jnp.exp(s_t - m_new)                       # (kt, S), f32
                alpha = jnp.exp(m - m_new)                        # (1, S)
                l = alpha * l + jnp.sum(prob, axis=0, keepdims=True)
                # y[c, q] += sum_k g[c, k] * prob[k, q]
                # bf16 MXU operands, f32 accumulation (v5e/v6e/v7x safe).
                y_t = jnp.dot(g_t.astype(jnp.bfloat16),
                              prob.astype(jnp.bfloat16),
                              preferred_element_type=jnp.float32)  # (c, S)
                acc = alpha * acc + y_t
                m = m_new

            y_cs = acc * pl.reciprocal(l, approx=True)            # (c, S)
            w_y = y_cs * A + B                       # W conv (1x1 dw) + BN, folded
            # x1 + x2 = x*gate + (W_y + x)
            out_ref[bi] = x * gate + w_y + x

    return kernel


def fused_gate_nonlocal(x_flat, gate, p3, *, scores_bf16=SCORES_IN_BF16):
    b, c, S = x_flat.shape
    per_batch = c * S * 4
    bt = _pick_nonlocal_batch_tile(b, per_batch)
    kt = _pick_key_tile(S)
    n_tiles = b // bt
    # TODO(synk): query-axis tiling for very large S (v7x 64 MiB VMEM) and for
    # b == 1 deployments (so both v7x TensorCores still get a parallel axis).
    est = (4 * bt * per_batch            # x in/out, double-buffered
           + 6 * c * S * 4               # x, theta, acc, y_t, key-tile temps
           + 4 * kt * S * 4              # score / prob tiles
           + (2 << 20))

    kernel = _make_nonlocal_kernel(bt, c, S, kt, scores_bf16)
    return pl.pallas_call(
        kernel,
        out_shape=jax.ShapeDtypeStruct((b, c, S), jnp.float32),
        grid=(n_tiles,),
        in_specs=[
            pl.BlockSpec((bt, c, S), lambda i: (i, 0, 0)),
            pl.BlockSpec((bt, c, 1), lambda i: (i, 0, 0)),
            pl.BlockSpec((c, 8), lambda i: (0, 0)),
        ],
        out_specs=pl.BlockSpec((bt, c, S), lambda i: (i, 0, 0)),
        compiler_params=pltpu.CompilerParams(
            dimension_semantics=("parallel",),
            vmem_limit_bytes=_vmem_limit(est),
        ),
    )(x_flat, gate, p3)


# --------------------------------------------------------------------------
# Parameters (deterministic, synthetic) and full forward.
# --------------------------------------------------------------------------
def init_params(key, c, h, w):
    ks = jax.random.split(key, 32)
    P = {}
    # ConvBNReLU depthwise weights: conv1 (c,1,h,1)->(c,h), conv2 (c,1,1,w)->(c,w)
    P["w1"] = jax.random.normal(ks[0], (c, h), jnp.float32) / jnp.sqrt(h)
    P["w2"] = jax.random.normal(ks[1], (c, w), jnp.float32) / jnp.sqrt(w)

    def bn_fold(kg, kb, km, kv):
        gamma = 1.0 + 0.1 * jax.random.normal(kg, (c,), jnp.float32)
        beta = 0.1 * jax.random.normal(kb, (c,), jnp.float32)
        mean = 0.1 * jax.random.normal(km, (c,), jnp.float32)
        var = 0.5 + jax.random.uniform(kv, (c,), jnp.float32)
        scale = gamma / jnp.sqrt(var + BN_EPS)
        shift = beta - mean * scale
        return scale, shift

    P["bn1_scale"], P["bn1_shift"] = bn_fold(ks[2], ks[3], ks[4], ks[5])
    P["bn2_scale"], P["bn2_shift"] = bn_fold(ks[6], ks[7], ks[8], ks[9])

    # Linear(c -> 2c), Linear(2c -> c)
    P["lin1_w"] = jax.random.normal(ks[10], (2 * c, c), jnp.float32) / jnp.sqrt(c)
    P["lin1_b"] = 0.1 * jax.random.normal(ks[11], (2 * c,), jnp.float32)
    P["lin2_w"] = jax.random.normal(ks[12], (c, 2 * c), jnp.float32) / jnp.sqrt(2 * c)
    P["lin2_b"] = 0.1 * jax.random.normal(ks[13], (c,), jnp.float32)

    # Intra_channel 1x1 depthwise convs (weight (c,1,1,1)->(c,), bias (c,))
    for name, k0, k1 in (("g", 14, 15), ("t", 16, 17), ("p", 18, 19)):
        P["w" + name] = jax.random.normal(ks[k0], (c,), jnp.float32)
        P["b" + name] = 0.1 * jax.random.normal(ks[k1], (c,), jnp.float32)

    # W: 1x1 depthwise conv + BN, folded into per-channel affine (A, B)
    wW = jax.random.normal(ks[20], (c,), jnp.float32)
    bW = 0.1 * jax.random.normal(ks[21], (c,), jnp.float32)
    gW = 1.0 + 0.1 * jax.random.normal(ks[22], (c,), jnp.float32)
    betaW = 0.1 * jax.random.normal(ks[23], (c,), jnp.float32)
    mW = 0.1 * jax.random.normal(ks[24], (c,), jnp.float32)
    vW = 0.5 + jax.random.uniform(ks[25], (c,), jnp.float32)
    sW = gW / jnp.sqrt(vW + BN_EPS)
    P["A"] = wW * sW
    P["B"] = (bW - mW) * sW + betaW
    return P


def bndc_forward(x, P, *, scores_bf16=SCORES_IN_BF16):
    b, c, h, w = x.shape
    assert h == w, "torch.mm in Inter_channel only type-checks when h == w"

    # ---- Inter_channel front end (kernel 1) ----
    p1 = jnp.stack([P["bn1_scale"], P["bn1_shift"], P["bn2_scale"], P["bn2_shift"]],
                   axis=1)                                          # (c, 4)
    M = inter_dot(x, P["w1"], P["w2"], p1)                          # (b, c), M[k, j]

    # torch.stack(num, dim=0).view(b, c) scramble: (c, b) flattened row-major
    num = M.T.reshape(b, c)

    # ---- tiny MLP + softmax gate: plain XLA (cheaper than a pallas_call) ----
    h1 = num @ P["lin1_w"].T + P["lin1_b"]
    o = h1 @ P["lin2_w"].T + P["lin2_b"]
    gate = jax.nn.softmax(o, axis=1)                                # (b, c)

    # ---- gate * x  +  Intra_channel(x), fused (kernel 3) ----
    S = h * w
    x_flat = x.reshape(b, c, S)
    p3 = jnp.stack([P["wg"], P["bg"], P["wt"], P["bt"], P["wp"], P["bp"],
                    P["A"], P["B"]], axis=1)                        # (c, 8)
    out = fused_gate_nonlocal(x_flat, gate.reshape(b, c, 1), p3,
                              scores_bf16=scores_bf16)
    return out.reshape(b, c, h, w)


# Pure-JAX reference for validation
def bndc_reference(x, P):
    b, c, h, w = x.shape
    xl1 = jnp.einsum("bchw,ch->bcw", x, P["w1"])
    xl1 = jnp.maximum(xl1 * P["bn1_scale"][None, :, None] + P["bn1_shift"][None, :, None], 0.0)
    xl2 = jnp.einsum("bchw,cw->bch", x, P["w2"])
    xl2 = jnp.maximum(xl2 * P["bn2_scale"][None, :, None] + P["bn2_shift"][None, :, None], 0.0)
    M = jnp.sum(xl1 * xl2, axis=-1)                                  # (b, c)
    num = M.T.reshape(b, c)
    h1 = num @ P["lin1_w"].T + P["lin1_b"]
    o = h1 @ P["lin2_w"].T + P["lin2_b"]
    gate = jax.nn.softmax(o, axis=1)
    x1 = x * gate[:, :, None, None]

    S = h * w
    xf = x.reshape(b, c, S)
    g_cs = xf * P["wg"][None, :, None] + P["bg"][None, :, None]
    th = xf * P["wt"][None, :, None] + P["bt"][None, :, None]
    ph = xf * P["wp"][None, :, None] + P["bp"][None, :, None]
    f = jnp.einsum("bcs,bct->bst", th, ph)
    fd = jax.nn.softmax(f, axis=-1)
    y = jnp.einsum("bst,bct->bcs", fd, g_cs)
    wy = y * P["A"][None, :, None] + P["B"][None, :, None]
    z = wy.reshape(b, c, h, w) + x
    return x1 + z


if __name__ == "__main__":
    b, c, h, w = 2, 4, 16, 16
    key = jax.random.PRNGKey(0)
    kx, kp = jax.random.split(key)
    x = jax.random.normal(kx, (b, c, h, w), jnp.float32)
    P = init_params(kp, c, h, w)

    fwd = jax.jit(bndc_forward)
    out = jax.block_until_ready(fwd(x, P))

    ref = jax.block_until_ready(bndc_reference(x, P))
    assert out.shape == (b, c, h, w)
    assert jnp.allclose(out, ref, rtol=1e-2, atol=1e-2), "mismatch vs reference"

    print("KERNEL_OK")
</pallas_src>

<mosaic_0001>
module attributes {stable_mosaic.version = 11 : i64} {
  func.func @_inter_dot_kernel(%arg0: i32, %arg1: memref<2x4x16x16xf32, #tpu.memory_space<vmem>>, %arg2: memref<4x16xf32, #tpu.memory_space<vmem>>, %arg3: memref<4x16xf32, #tpu.memory_space<vmem>>, %arg4: memref<4x4xf32, #tpu.memory_space<vmem>>, %arg5: memref<1x2x4xf32, #tpu.memory_space<vmem>>) attributes {dimension_semantics = [#tpu.dimension_semantics<parallel>], iteration_bounds = array<i64: 1>, scalar_prefetch = 0 : i64, scratch_operands = 0 : i64, tpu.core_type = #tpu.core_type<tc>, window_params = [{transform_indices = @transform_0, window_bounds = array<i64: 2, 4, 16, 16>}, {pipeline_mode = #tpu.pipeline_mode<synchronous>, transform_indices = @transform_1, window_bounds = array<i64: 4, 16>}, {pipeline_mode = #tpu.pipeline_mode<synchronous>, transform_indices = @transform_2, window_bounds = array<i64: 4, 16>}, {pipeline_mode = #tpu.pipeline_mode<synchronous>, transform_indices = @transform_3, window_bounds = array<i64: 4, 4>}, {transform_indices = @transform_4, window_bounds = array<i64: 1, 2, 4>}]} {
    %c0 = arith.constant 0 : index
    %c0_0 = arith.constant 0 : index
    %c0_1 = arith.constant 0 : index
    %c0_2 = arith.constant 0 : index
    %0 = vector.load %arg1[%c0, %c0_0, %c0_1, %c0_2] : memref<2x4x16x16xf32, #tpu.memory_space<vmem>>, vector<2x4x16x16xf32>
    %c0_3 = arith.constant 0 : index
    %c0_4 = arith.constant 0 : index
    %1 = vector.load %arg2[%c0_3, %c0_4] : memref<4x16xf32, #tpu.memory_space<vmem>>, vector<4x16xf32>
    %2 = vector.shape_cast %1 : vector<4x16xf32> to vector<1x4x16x1xf32>
    %c0_5 = arith.constant 0 : index
    %c0_6 = arith.constant 0 : index
    %3 = vector.load %arg3[%c0_5, %c0_6] : memref<4x16xf32, #tpu.memory_space<vmem>>, vector<4x16xf32>
    %4 = vector.shape_cast %3 : vector<4x16xf32> to vector<1x4x1x16xf32>
    %c0_7 = arith.constant 0 : index
    %c0_8 = arith.constant 0 : index
    %5 = vector.load %arg4[%c0_7, %c0_8] : memref<4x4xf32, #tpu.memory_space<vmem>>, vector<4x4xf32>
    %6 = vector.extract_strided_slice %5 {offsets = [0, 0], sizes = [4, 1], strides = [1, 1]} : vector<4x4xf32> to vector<4x1xf32>
    %7 = vector.shape_cast %6 : vector<4x1xf32> to vector<1x4x1xf32>
    %8 = vector.extract_strided_slice %5 {offsets = [0, 1], sizes = [4, 1], strides = [1, 1]} : vector<4x4xf32> to vector<4x1xf32>
    %9 = vector.shape_cast %8 : vector<4x1xf32> to vector<1x4x1xf32>
    %10 = vector.extract_strided_slice %5 {offsets = [0, 2], sizes = [4, 1], strides = [1, 1]} : vector<4x4xf32> to vector<4x1xf32>
    %11 = vector.shape_cast %10 : vector<4x1xf32> to vector<1x4x1xf32>
    %12 = vector.extract_strided_slice %5 {offsets = [0, 3], sizes = [4, 1], strides = [1, 1]} : vector<4x4xf32> to vector<4x1xf32>
    %13 = vector.shape_cast %12 : vector<4x1xf32> to vector<1x4x1xf32>
    %14 = vector.broadcast %2 : vector<1x4x16x1xf32> to vector<2x4x16x16xf32>
    %15 = arith.mulf %0, %14 : vector<2x4x16x16xf32>
    %cst = arith.constant dense<0.000000e+00> : vector<2x4x16xf32>
    %16 = vector.multi_reduction <add>, %15, %cst [2] : vector<2x4x16x16xf32> to vector<2x4x16xf32>
    %17 = vector.broadcast %7 : vector<1x4x1xf32> to vector<2x4x16xf32>
    %18 = arith.mulf %16, %17 : vector<2x4x16xf32>
    %19 = vector.broadcast %9 : vector<1x4x1xf32> to vector<2x4x16xf32>
    %20 = arith.addf %18, %19 : vector<2x4x16xf32>
    %cst_9 = arith.constant 0.000000e+00 : f32
    %21 = vector.broadcast %cst_9 : f32 to vector<2x4x16xf32>
    %22 = arith.maximumf %20, %21 : vector<2x4x16xf32>
    %23 = vector.broadcast %4 : vector<1x4x1x16xf32> to vector<2x4x16x16xf32>
    %24 = arith.mulf %0, %23 : vector<2x4x16x16xf32>
    %cst_10 = arith.constant dense<0.000000e+00> : vector<2x4x16xf32>
    %25 = vector.multi_reduction <add>, %24, %cst_10 [3] : vector<2x4x16x16xf32> to vector<2x4x16xf32>
    %26 = vector.broadcast %11 : vector<1x4x1xf32> to vector<2x4x16xf32>
    %27 = arith.mulf %25, %26 : vector<2x4x16xf32>
    %28 = vector.broadcast %13 : vector<1x4x1xf32> to vector<2x4x16xf32>
    %29 = arith.addf %27, %28 : vector<2x4x16xf32>
    %cst_11 = arith.constant 0.000000e+00 : f32
    %30 = vector.broadcast %cst_11 : f32 to vector<2x4x16xf32>
    %31 = arith.maximumf %29, %30 : vector<2x4x16xf32>
    %32 = arith.mulf %22, %31 : vector<2x4x16xf32>
    %cst_12 = arith.constant dense<0.000000e+00> : vector<2x4xf32>
    %33 = vector.multi_reduction <add>, %32, %cst_12 [2] : vector<2x4x16xf32> to vector<2x4xf32>
    %c0_13 = arith.constant 0 : index
    %c0_14 = arith.constant 0 : index
    %c0_15 = arith.constant 0 : index
    %34 = vector.load %arg5[%c0_13, %c0_14, %c0_15] : memref<1x2x4xf32, #tpu.memory_space<vmem>>, vector<1x2x4xf32>
    %35 = vector.shape_cast %34 : vector<1x2x4xf32> to vector<2x4xf32>
    %36 = vector.shape_cast %33 : vector<2x4xf32> to vector<1x2x4xf32>
    tpu.vector_store %arg5[%c0_13, %c0_14, %c0_15], %36 {strides = array<i32>} : memref<1x2x4xf32, #tpu.memory_space<vmem>>, vector<1x2x4xf32>,
    return
  }
  func.func @transform_0(%arg0: i32) -> (i32, i32, i32, i32) {
    %c0_i32 = arith.constant 0 : i32
    %c0_i32_0 = arith.constant 0 : i32
    %c0_i32_1 = arith.constant 0 : i32
    %c0_i32_2 = arith.constant 0 : i32
    return %arg0, %c0_i32, %c0_i32_0, %c0_i32_1 : i32, i32, i32, i32
  }
  func.func @transform_1(%arg0: i32) -> (i32, i32) {
    %c0_i32 = arith.constant 0 : i32
    %c0_i32_0 = arith.constant 0 : i32
    %c0_i32_1 = arith.constant 0 : i32
    return %c0_i32, %c0_i32_0 : i32, i32
  }
  func.func @transform_2(%arg0: i32) -> (i32, i32) {
    %c0_i32 = arith.constant 0 : i32
    %c0_i32_0 = arith.constant 0 : i32
    %c0_i32_1 = arith.constant 0 : i32
    return %c0_i32, %c0_i32_0 : i32, i32
  }
  func.func @transform_3(%arg0: i32) -> (i32, i32) {
    %c0_i32 = arith.constant 0 : i32
    %c0_i32_0 = arith.constant 0 : i32
    %c0_i32_1 = arith.constant 0 : i32
    return %c0_i32, %c0_i32_0 : i32, i32
  }
  func.func @transform_4(%arg0: i32) -> (i32, i32, i32) {
    %c0_i32 = arith.constant 0 : i32
    %c0_i32_0 = arith.constant 0 : i32
    %c0_i32_1 = arith.constant 0 : i32
    return %arg0, %c0_i32, %c0_i32_0 : i32, i32, i32
  }
}

module attributes {stable_mosaic.version = 11 : i64} {
  func.func @kernel(%arg0: i32, %arg1: memref<1x4x256xf32, #tpu.memory_space<vmem>>, %arg2: memref<1x4x1xf32, #tpu.memory_space<vmem>>, %arg3: memref<4x8xf32, #tpu.memory_space<vmem>>, %arg4: memref<1x4x256xf32, #tpu.memory_space<vmem>>) attributes {dimension_semantics = [#tpu.dimension_semantics<parallel>], iteration_bounds = array<i64: 2>, scalar_prefetch = 0 : i64, scratch_operands = 0 : i64, tpu.core_type = #tpu.core_type<tc>, window_params = [{transform_indices = @transform_0, window_bounds = array<i64: 1, 4, 256>}, {transform_indices = @transform_1, window_bounds = array<i64: 1, 4, 1>}, {pipeline_mode = #tpu.pipeline_mode<synchronous>, transform_indices = @transform_2, window_bounds = array<i64: 4, 8>}, {transform_indices = @transform_3, window_bounds = array<i64: 1, 4, 256>}]} {
    %c0 = arith.constant 0 : index
    %c0_0 = arith.constant 0 : index
    %0 = vector.load %arg3[%c0, %c0_0] : memref<4x8xf32, #tpu.memory_space<vmem>>, vector<4x8xf32>
    %1 = vector.extract_strided_slice %0 {offsets = [0, 0], sizes = [4, 1], strides = [1, 1]} : vector<4x8xf32> to vector<4x1xf32>
    %2 = vector.extract_strided_slice %0 {offsets = [0, 1], sizes = [4, 1], strides = [1, 1]} : vector<4x8xf32> to vector<4x1xf32>
    %3 = vector.extract_strided_slice %0 {offsets = [0, 2], sizes = [4, 1], strides = [1, 1]} : vector<4x8xf32> to vector<4x1xf32>
    %4 = vector.extract_strided_slice %0 {offsets = [0, 3], sizes = [4, 1], strides = [1, 1]} : vector<4x8xf32> to vector<4x1xf32>
    %5 = vector.extract_strided_slice %0 {offsets = [0, 4], sizes = [4, 1], strides = [1, 1]} : vector<4x8xf32> to vector<4x1xf32>
    %6 = vector.extract_strided_slice %0 {offsets = [0, 5], sizes = [4, 1], strides = [1, 1]} : vector<4x8xf32> to vector<4x1xf32>
    %7 = vector.extract_strided_slice %0 {offsets = [0, 6], sizes = [4, 1], strides = [1, 1]} : vector<4x8xf32> to vector<4x1xf32>
    %8 = vector.extract_strided_slice %0 {offsets = [0, 7], sizes = [4, 1], strides = [1, 1]} : vector<4x8xf32> to vector<4x1xf32>
    %c0_1 = arith.constant 0 : index
    %c0_2 = arith.constant 0 : index
    %c0_3 = arith.constant 0 : index
    %9 = vector.load %arg1[%c0_1, %c0_2, %c0_3] : memref<1x4x256xf32, #tpu.memory_space<vmem>>, vector<1x4x256xf32>
    %10 = vector.shape_cast %9 : vector<1x4x256xf32> to vector<4x256xf32>
    %c0_4 = arith.constant 0 : index
    %c0_5 = arith.constant 0 : index
    %c0_6 = arith.constant 0 : index
    %11 = vector.load %arg2[%c0_4, %c0_5, %c0_6] : memref<1x4x1xf32, #tpu.memory_space<vmem>>, vector<1x4x1xf32>
    %12 = vector.shape_cast %11 : vector<1x4x1xf32> to vector<4x1xf32>
    %13 = vector.broadcast %3 : vector<4x1xf32> to vector<4x256xf32>
    %14 = arith.mulf %10, %13 : vector<4x256xf32>
    %15 = vector.broadcast %4 : vector<4x1xf32> to vector<4x256xf32>
    %16 = arith.addf %14, %15 : vector<4x256xf32>
    %cst = arith.constant 0xFF800000 : f32
    %17 = vector.broadcast %cst : f32 to vector<1x256xf32>
    %cst_7 = arith.constant 0.000000e+00 : f32
    %18 = vector.broadcast %cst_7 : f32 to vector<1x256xf32>
    %cst_8 = arith.constant 0.000000e+00 : f32
    %19 = vector.broadcast %cst_8 : f32 to vector<4x256xf32>
    %20 = vector.broadcast %5 : vector<4x1xf32> to vector<4x256xf32>
    %21 = arith.mulf %10, %20 : vector<4x256xf32>
    %22 = vector.broadcast %6 : vector<4x1xf32> to vector<4x256xf32>
    %23 = arith.addf %21, %22 : vector<4x256xf32>
    %24 = vector.broadcast %1 : vector<4x1xf32> to vector<4x256xf32>
    %25 = arith.mulf %10, %24 : vector<4x256xf32>
    %26 = vector.broadcast %2 : vector<4x1xf32> to vector<4x256xf32>
    %27 = arith.addf %25, %26 : vector<4x256xf32>
    %cst_9 = arith.constant dense<0.000000e+00> : vector<256x256xf32>
    %28 = tpu.matmul %23, %16, %cst_9 {dimension_numbers = #tpu.dot_dimension_numbers<[0], [0], [1], [1], [0, 1, 1, 1], [], []>} : vector<4x256xf32>, vector<4x256xf32>, vector<256x256xf32> -> vector<256x256xf32>
    %cst_10 = arith.constant dense<0xFF800000> : vector<256xf32>
    %29 = vector.multi_reduction <maximumf>, %28, %cst_10 [0] : vector<256x256xf32> to vector<256xf32>
    %30 = vector.shape_cast %29 : vector<256xf32> to vector<1x256xf32>
    %31 = arith.maximumf %17, %30 : vector<1x256xf32>
    %32 = vector.broadcast %31 : vector<1x256xf32> to vector<256x256xf32>
    %33 = arith.subf %28, %32 : vector<256x256xf32>
    %34 = math.exp %33 : vector<256x256xf32>
    %35 = arith.subf %17, %31 : vector<1x256xf32>
    %36 = math.exp %35 : vector<1x256xf32>
    %37 = arith.mulf %36, %18 : vector<1x256xf32>
    %cst_11 = arith.constant dense<0.000000e+00> : vector<256xf32>
    %38 = vector.multi_reduction <add>, %34, %cst_11 [0] : vector<256x256xf32> to vector<256xf32>
    %39 = vector.shape_cast %38 : vector<256xf32> to vector<1x256xf32>
    %40 = arith.addf %37, %39 : vector<1x256xf32>
    %41 = arith.truncf %27 : vector<4x256xf32> to vector<4x256xbf16>
    %42 = arith.truncf %34 : vector<256x256xf32> to vector<256x256xbf16>
    %cst_12 = arith.constant dense<0.000000e+00> : vector<4x256xf32>
    %43 = tpu.matmul %41, %42, %cst_12 {dimension_numbers = #tpu.dot_dimension_numbers<[1], [0], [0], [1], [0, 0, 1, 1], [], []>} : vector<4x256xbf16>, vector<256x256xbf16>, vector<4x256xf32> -> vector<4x256xf32>
    %44 = vector.broadcast %36 : vector<1x256xf32> to vector<4x256xf32>
    %45 = arith.mulf %44, %19 : vector<4x256xf32>
    %46 = arith.addf %45, %43 : vector<4x256xf32>
    %47 = tpu.reciprocal %40 {approx = true} : vector<1x256xf32> -> vector<1x256xf32>
    %48 = vector.broadcast %47 : vector<1x256xf32> to vector<4x256xf32>
    %49 = arith.mulf %46, %48 : vector<4x256xf32>
    %50 = vector.broadcast %7 : vector<4x1xf32> to vector<4x256xf32>
    %51 = arith.mulf %49, %50 : vector<4x256xf32>
    %52 = vector.broadcast %8 : vector<4x1xf32> to vector<4x256xf32>
    %53 = arith.addf %51, %52 : vector<4x256xf32>
    %54 = vector.broadcast %12 : vector<4x1xf32> to vector<4x256xf32>
    %55 = arith.mulf %10, %54 : vector<4x256xf32>
    %56 = arith.addf %55, %53 : vector<4x256xf32>
    %57 = arith.addf %56, %10 : vector<4x256xf32>
    %c0_13 = arith.constant 0 : index
    %c0_14 = arith.constant 0 : index
    %c0_15 = arith.constant 0 : index
    %58 = vector.load %arg4[%c0_13, %c0_14, %c0_15] : memref<1x4x256xf32, #tpu.memory_space<vmem>>, vector<1x4x256xf32>
    %59 = vector.shape_cast %58 : vector<1x4x256xf32> to vector<4x256xf32>
    %60 = vector.shape_cast %57 : vector<4x256xf32> to vector<1x4x256xf32>
    tpu.vector_store %arg4[%c0_13, %c0_14, %c0_15], %60 {strides = array<i32>} : memref<1x4x256xf32, #tpu.memory_space<vmem>>, vector<1x4x256xf32>,
    return
  }
  func.func @transform_0(%arg0: i32) -> (i32, i32, i32) {
    %c0_i32 = arith.constant 0 : i32
    %c0_i32_0 = arith.constant 0 : i32
    %c0_i32_1 = arith.constant 0 : i32
    return %arg0, %c0_i32, %c0_i32_0 : i32, i32, i32
  }
  func.func @transform_1(%arg0: i32) -> (i32, i32, i32) {
    %c0_i32 = arith.constant 0 : i32
    %c0_i32_0 = arith.constant 0 : i32
    %c0_i32_1 = arith.constant 0 : i32
    return %arg0, %c0_i32, %c0_i32_0 : i32, i32, i32
  }
  func.func @transform_2(%arg0: i32) -> (i32, i32) {
    %c0_i32 = arith.constant 0 : i32
    %c0_i32_0 = arith.constant 0 : i32
    %c0_i32_1 = arith.constant 0 : i32
    return %c0_i32, %c0_i32_0 : i32, i32
  }
  func.func @transform_3(%arg0: i32) -> (i32, i32, i32) {
    %c0_i32 = arith.constant 0 : i32
    %c0_i32_0 = arith.constant 0 : i32
    %c0_i32_1 = arith.constant 0 : i32
    return %arg0, %c0_i32, %c0_i32_0 : i32, i32, i32
  }
}

</mosaic_0001>

<llo_original>
// kernel: bndc_forward.2
$region0: #{bndc_forward.2}
  #allocation0 [shape = 'u32[]', space=smem, size = 0x4, offset = 0x4, fixed_abs, tag = 'smem constant byte address 0x4 - core index']
  #allocation1 [shape = 'u32[144,128]{1,0:T(1,128)}', space=vmem, size = 0x12000, scoped, tag = 'internal scratch']
  %s0 = inlined_call_operand.vmem [shape: f32[2,4,16,16], index: 0, kind: input, shape index: {}]
  %s1 = inlined_call_operand.vmem [shape: f32[4,16], index: 1, kind: input, shape index: {}]
  %s2 = inlined_call_operand.vmem [shape: f32[4,16], index: 2, kind: input, shape index: {}]
  %s3 = inlined_call_operand.vmem [shape: f32[4,4], index: 3, kind: input, shape index: {}]
  %s4 = inlined_call_operand.vmem [shape: f32[1,2,4], index: 4, kind: output, shape index: {}]
  %s5 = sld [smem:[#allocation0]]
  $region26: #{bndc_forward.2} parent=0
    _
  %s7 = ssub.s32 1, %s5
  %s8 = scalar_select 0, %s7, %s5
  // Predicated region
  $region2: #{bndc_forward.2} parent=0 // pred_check
    _
  $region3: #{bndc_forward.2} parent=0 // pred_check_branch
    %10 = sbr.rel (0) target = $region5
  $region4: #{bndc_forward.2} parent=0 // pred_region
    _
  $region5: #{bndc_forward.2} parent=0 // pred_fallthru
    _
  // Predicated region
  $region6: #{bndc_forward.2} parent=0 // pred_check
    _
  $region7: #{bndc_forward.2} parent=0 // pred_check_branch
    %12 = sbr.rel (0) target = $region9
  $region8: #{bndc_forward.2} parent=0 // pred_region
    _
  $region9: #{bndc_forward.2} parent=0 // pred_fallthru
    _
  // Predicated region
  $region10: #{bndc_forward.2} parent=0 // pred_check
    _
  $region11: #{bndc_forward.2} parent=0 // pred_check_branch
    %14 = sbr.rel (0) target = $region13
  $region12: #{bndc_forward.2} parent=0 // pred_region
    _
  $region13: #{bndc_forward.2} parent=0 // pred_fallthru
    _
  // Predicated region
  $region14: #{bndc_forward.2} parent=0 // pred_check
    _
  $region15: #{bndc_forward.2} parent=0 // pred_check_branch
    %16 = sbr.rel (0) target = $region17
  $region16: #{bndc_forward.2} parent=0 // pred_region
    _
  $region17: #{bndc_forward.2} parent=0 // pred_fallthru
    _
  %v17 = vld [vmem:[%s0] sm:$0xff]
  %v18 = vld [vmem:[%s0 + $0x8] sm:$0xff]
  %v19 = vld [vmem:[%s0 + $0x10] sm:$0xff]
  %v20 = vld [vmem:[%s0 + $0x18] sm:$0xff]
  %v21 = vld [vmem:[%s0 + $0x20] sm:$0xff]
  %v22 = vld [vmem:[%s0 + $0x28] sm:$0xff]
  %v23 = vld [vmem:[%s0 + $0x30] sm:$0xff]
  %v24 = vld [vmem:[%s0 + $0x38] sm:$0xff]
  %v25 = vld [vmem:[%s0 + $0x40] sm:$0xff]
  %v26 = vld [vmem:[%s0 + $0x48] sm:$0xff]
  %v27 = vld [vmem:[%s0 + $0x50] sm:$0xff]
  %v28 = vld [vmem:[%s0 + $0x58] sm:$0xff]
  %v29 = vld [vmem:[%s0 + $0x60] sm:$0xff]
  %v30 = vld [vmem:[%s0 + $0x68] sm:$0xff]
  %v31 = vld [vmem:[%s0 + $0x70] sm:$0xff]
  %v32 = vld [vmem:[%s0 + $0x78] sm:$0xff]
  %v33 = vld [vmem:[%s1] sm:$0xf]
  %v34 = vlaneseq
  %v35 = vshrl.u32 %v34, 7
  %v36 = vsub.s32 0, %v35
  %v37 = vrot.slane %v33, %v36
  %39 = vbcast.lane.b32.xlu0 %v37, 256
  %v40 = vpop.permute.xlu0 %39
  %s42 = sor.u32 256, 8
  %43 = vbcast.lane.b32.xlu0 %v37, %s42
  %v44 = vpop.permute.xlu0 %43
  %v45 = vlaneseq
  %v46 = vshrl.u32 %v45, 7
  %v47 = vsub.s32 1, %v46
  %v48 = vrot.slane %v33, %v47
  %50 = vbcast.lane.b32.xlu0 %v48, 256
  %v51 = vpop.permute.xlu0 %50
  %s53 = sor.u32 256, 8
  %54 = vbcast.lane.b32.xlu0 %v48, %s53
  %v55 = vpop.permute.xlu0 %54
  %v56 = vlaneseq
  %v57 = vshrl.u32 %v56, 7
  %v58 = vsub.s32 2, %v57
  %v59 = vrot.slane %v33, %v58
  %61 = vbcast.lane.b32.xlu0 %v59, 256
  %v62 = vpop.permute.xlu0 %61
  %s64 = sor.u32 256, 8
  %65 = vbcast.lane.b32.xlu0 %v59, %s64
  %v66 = vpop.permute.xlu0 %65
  %v67 = vlaneseq
  %v68 = vshrl.u32 %v67, 7
  %v69 = vsub.s32 3, %v68
  %v70 = vrot.slane %v33, %v69
  %72 = vbcast.lane.b32.xlu0 %v70, 256
  %v73 = vpop.permute.xlu0 %72
  %s75 = sor.u32 256, 8
  %76 = vbcast.lane.b32.xlu0 %v70, %s75
  %v77 = vpop.permute.xlu0 %76
  %v78 = vld [vmem:[%s2] sm:$0xf]
  %v81 = vunpack.c.l.s4 1966171168
  %v82 = vunpack.c.0.s8 %v81
  %v83 = vlaneseq
  %v84 = vshrl.u32 %v83, 7
  %v85 = vsub.s32 %v82, %v84
  %v86 = vrot.slane %v78, %v85
  %v87 = vcombine.high %v86, %v86
  %v89 = vunpack.c.l.s4 1966171168
  %v90 = vunpack.c.0.s8 %v89
  %v91 = vlaneseq
  %v92 = vshrl.u32 %v91, 7
  %v93 = vsub.s32 %v90, %v92
  %v94 = vrot.slane %v86, %v93
  %v96 = vunpack.c.l.s4 1966171168
  %v97 = vunpack.c.0.s8 %v96
  %v98 = vlaneseq
  %v99 = vshrl.u32 %v98, 7
  %v100 = vsub.s32 %v97, %v99
  %v101 = vrot.slane %v87, %v100
  %v102 = vcombine.high %v94, %v94
  %v103 = vcombine.high %v101, %v101
  %v104 = vld [vmem:[%s3] sm:$0xf]
  %v105 = vmul.f32 %v17, %v40
  %v106 = vmul.f32 %v18, %v44
  %v107 = vmul.f32 %v19, %v51
  %v108 = vmul.f32 %v20, %v55
  %v109 = vmul.f32 %v21, %v62
  %v110 = vmul.f32 %v22, %v66
  %v111 = vmul.f32 %v23, %v73
  %v112 = vmul.f32 %v24, %v77
  %v113 = vmul.f32 %v25, %v40
  %v114 = vmul.f32 %v26, %v44
  %v115 = vmul.f32 %v27, %v51
  %v116 = vmul.f32 %v28, %v55
  %v117 = vmul.f32 %v29, %v62
  %v118 = vmul.f32 %v30, %v66
  %v119 = vmul.f32 %v31, %v73
  %v120 = vmul.f32 %v32, %v77
  %vm121 = vcmask 130048
  %v122 = vsel %vm121, %v105, 0.0
  %v123 = vsel %vm121, %v106, 0.0
  %v124 = vadd.f32 %v122, %v123
  %v125 = vrot.slane %v124, 4
  %v126 = vadd.f32 %v124, %v125
  %v127 = vrot.slane %v126, 2
  %v128 = vadd.f32 %v126, %v127
  %v129 = vrot.slane %v128, 1
  %v130 = vadd.f32 %v128, %v129
  %v131 = vsel %vm121, %v107, 0.0
  %v132 = vsel %vm121, %v108, 0.0
  %v133 = vadd.f32 %v131, %v132
  %v134 = vrot.slane %v133, 4
  %v135 = vadd.f32 %v133, %v134
  %v136 = vrot.slane %v135, 2
  %v137 = vadd.f32 %v135, %v136
  %v138 = vrot.slane %v137, 1
  %v139 = vadd.f32 %v137, %v138
  %v140 = vsel %vm121, %v109, 0.0
  %v141 = vsel %vm121, %v110, 0.0
  %v142 = vadd.f32 %v140, %v141
  %v143 = vrot.slane %v142, 4
  %v144 = vadd.f32 %v142, %v143
  %v145 = vrot.slane %v144, 2
  %v146 = vadd.f32 %v144, %v145
  %v147 = vrot.slane %v146, 1
  %v148 = vadd.f32 %v146, %v147
  %v149 = vsel %vm121, %v111, 0.0
  %v150 = vsel %vm121, %v112, 0.0
  %v151 = vadd.f32 %v149, %v150
  %v152 = vrot.slane %v151, 4
  %v153 = vadd.f32 %v151, %v152
  %v154 = vrot.slane %v153, 2
  %v155 = vadd.f32 %v153, %v154
  %v156 = vrot.slane %v155, 1
  %v157 = vadd.f32 %v155, %v156
  %v158 = vsel %vm121, %v113, 0.0
  %v159 = vsel %vm121, %v114, 0.0
  %v160 = vadd.f32 %v158, %v159
  %v161 = vrot.slane %v160, 4
  %v162 = vadd.f32 %v160, %v161
  %v163 = vrot.slane %v162, 2
  %v164 = vadd.f32 %v162, %v163
  %v165 = vrot.slane %v164, 1
  %v166 = vadd.f32 %v164, %v165
  %v167 = vsel %vm121, %v115, 0.0
  %v168 = vsel %vm121, %v116, 0.0
  %v169 = vadd.f32 %v167, %v168
  %v170 = vrot.slane %v169, 4
  %v171 = vadd.f32 %v169, %v170
  %v172 = vrot.slane %v171, 2
  %v173 = vadd.f32 %v171, %v172
  %v174 = vrot.slane %v173, 1
  %v175 = vadd.f32 %v173, %v174
  %v176 = vsel %vm121, %v117, 0.0
  %v177 = vsel %vm121, %v118, 0.0
  %v178 = vadd.f32 %v176, %v177
  %v179 = vrot.slane %v178, 4
  %v180 = vadd.f32 %v178, %v179
  %v181 = vrot.slane %v180, 2
  %v182 = vadd.f32 %v180, %v181
  %v183 = vrot.slane %v182, 1
  %v184 = vadd.f32 %v182, %v183
  %v185 = vsel %vm121, %v119, 0.0
  %v186 = vsel %vm121, %v120, 0.0
  %v187 = vadd.f32 %v185, %v186
  %v188 = vrot.slane %v187, 4
  %v189 = vadd.f32 %v187, %v188
  %v190 = vrot.slane %v189, 2
  %v191 = vadd.f32 %v189, %v190
  %v192 = vrot.slane %v191, 1
  %v193 = vadd.f32 %v191, %v192
  %195 = vset.pattern.permute.xlu0 0
  %196 = vperm.xlu0 %195, %v104
  %v197 = vpop.permute.xlu0 %196
  %v198 = vrot.slane %v197, 1
  %v199 = vrot.slane %v197, 2
  %v200 = vrot.slane %v197, 3
  %v205 = vmul.f32 %v130, %v197
  %v206 = vmul.f32 %v139, %v198
  %v207 = vmul.f32 %v148, %v199
  %v208 = vmul.f32 %v157, %v200
  %v209 = vmul.f32 %v166, %v197
  %v210 = vmul.f32 %v175, %v198
  %v211 = vmul.f32 %v184, %v199
  %v212 = vmul.f32 %v193, %v200
  %213 = vset.pattern.permute.xlu0 1
  %214 = vperm.xlu0 %213, %v104
  %v215 = vpop.permute.xlu0 %214
  %v216 = vrot.slane %v215, 1
  %v217 = vrot.slane %v215, 2
  %v218 = vrot.slane %v215, 3
  %v223 = vadd.f32 %v205, %v215
  %v224 = vadd.f32 %v206, %v216
  %v225 = vadd.f32 %v207, %v217
  %v226 = vadd.f32 %v208, %v218
  %v227 = vadd.f32 %v209, %v215
  %v228 = vadd.f32 %v210, %v216
  %v229 = vadd.f32 %v211, %v217
  %v230 = vadd.f32 %v212, %v218
  %v231 = vmax.f32 %v223, 0.0
  %v232 = vmax.f32 %v224, 0.0
  %v233 = vmax.f32 %v225, 0.0
  %v234 = vmax.f32 %v226, 0.0
  %v235 = vmax.f32 %v227, 0.0
  %v236 = vmax.f32 %v228, 0.0
  %v237 = vmax.f32 %v229, 0.0
  %v238 = vmax.f32 %v230, 0.0
  %v239 = vlaneseq
  %v240 = vshrl.u32 %v239, 7
  %v241 = vsub.s32 0, %v240
  %v242 = vrot.slane %v94, %v241
  %v243 = vlaneseq
  %v244 = vshrl.u32 %v243, 7
  %v245 = vsub.s32 0, %v244
  %v246 = vrot.slane %v101, %v245
  %v247 = vlaneseq
  %v248 = vshrl.u32 %v247, 7
  %v249 = vsub.s32 0, %v248
  %v250 = vrot.slane %v102, %v249
  %v251 = vlaneseq
  %v252 = vshrl.u32 %v251, 7
  %v253 = vsub.s32 0, %v252
  %v254 = vrot.slane %v103, %v253
  %v259 = vmul.f32 %v17, %v242
  %v260 = vmul.f32 %v18, %v242
  %v261 = vmul.f32 %v19, %v246
  %v262 = vmul.f32 %v20, %v246
  %v263 = vmul.f32 %v21, %v250
  %v264 = vmul.f32 %v22, %v250
  %v265 = vmul.f32 %v23, %v254
  %v266 = vmul.f32 %v24, %v254
  %v267 = vmul.f32 %v25, %v242
  %v268 = vmul.f32 %v26, %v242
  %v269 = vmul.f32 %v27, %v246
  %v270 = vmul.f32 %v28, %v246
  %v271 = vmul.f32 %v29, %v250
  %v272 = vmul.f32 %v30, %v250
  %v273 = vmul.f32 %v31, %v254
  %v274 = vmul.f32 %v32, %v254
  %v275 = vsel %vm121, %v259, 0.0
  %276 = vadd.xlane.f32.xlu0 %v275
  %v277 = vpop.xlane.xlu0 %276
  %v278 = vsel %vm121, %v260, 0.0
  %279 = vadd.xlane.f32.xlu0 %v278
  %v280 = vpop.xlane.xlu0 %279
  %v281 = vsel %vm121, %v261, 0.0
  %282 = vadd.xlane.f32.xlu0 %v281
  %v283 = vpop.xlane.xlu0 %282
  %v284 = vsel %vm121, %v262, 0.0
  %285 = vadd.xlane.f32.xlu0 %v284
  %v286 = vpop.xlane.xlu0 %285
  %v287 = vsel %vm121, %v263, 0.0
  %288 = vadd.xlane.f32.xlu0 %v287
  %v289 = vpop.xlane.xlu0 %288
  %v290 = vsel %vm121, %v264, 0.0
  %291 = vadd.xlane.f32.xlu0 %v290
  %v292 = vpop.xlane.xlu0 %291
  %v293 = vsel %vm121, %v265, 0.0
  %294 = vadd.xlane.f32.xlu0 %v293
  %v295 = vpop.xlane.xlu0 %294
  %v296 = vsel %vm121, %v266, 0.0
  %297 = vadd.xlane.f32.xlu0 %v296
  %v298 = vpop.xlane.xlu0 %297
  %v299 = vsel %vm121, %v267, 0.0
  %300 = vadd.xlane.f32.xlu0 %v299
  %v301 = vpop.xlane.xlu0 %300
  %v302 = vsel %vm121, %v268, 0.0
  %303 = vadd.xlane.f32.xlu0 %v302
  %v304 = vpop.xlane.xlu0 %303
  %v305 = vsel %vm121, %v269, 0.0
  %306 = vadd.xlane.f32.xlu0 %v305
  %v307 = vpop.xlane.xlu0 %306
  %v308 = vsel %vm121, %v270, 0.0
  %309 = vadd.xlane.f32.xlu0 %v308
  %v310 = vpop.xlane.xlu0 %309
  %v311 = vsel %vm121, %v271, 0.0
  %312 = vadd.xlane.f32.xlu0 %v311
  %v313 = vpop.xlane.xlu0 %312
  %v314 = vsel %vm121, %v272, 0.0
  %315 = vadd.xlane.f32.xlu0 %v314
  %v316 = vpop.xlane.xlu0 %315
  %v317 = vsel %vm121, %v273, 0.0
  %318 = vadd.xlane.f32.xlu0 %v317
  %v319 = vpop.xlane.xlu0 %318
  %v320 = vsel %vm121, %v274, 0.0
  %321 = vadd.xlane.f32.xlu0 %v320
  %v322 = vpop.xlane.xlu0 %321
  %323 = vset.pattern.permute.xlu0 2
  %324 = vperm.xlu0 %323, %v104
  %v325 = vpop.permute.xlu0 %324
  %v326 = vlaneseq
  %v327 = vshrl.u32 %v326, 7
  %v328 = vsub.s32 0, %v327
  %v329 = vrot.slane %v325, %v328
  %v330 = vlaneseq
  %v331 = vshrl.u32 %v330, 7
  %v332 = vsub.s32 1, %v331
  %v333 = vrot.slane %v325, %v332
  %v334 = vlaneseq
  %v335 = vshrl.u32 %v334, 7
  %v336 = vsub.s32 2, %v335
  %v337 = vrot.slane %v325, %v336
  %v338 = vlaneseq
  %v339 = vshrl.u32 %v338, 7
  %v340 = vsub.s32 3, %v339
  %v341 = vrot.slane %v325, %v340
  %v346 = vmul.f32 %v277, %v329
  %v347 = vmul.f32 %v280, %v329
  %v348 = vmul.f32 %v283, %v333
  %v349 = vmul.f32 %v286, %v333
  %v350 = vmul.f32 %v289, %v337
  %v351 = vmul.f32 %v292, %v337
  %v352 = vmul.f32 %v295, %v341
  %v353 = vmul.f32 %v298, %v341
  %v354 = vmul.f32 %v301, %v329
  %v355 = vmul.f32 %v304, %v329
  %v356 = vmul.f32 %v307, %v333
  %v357 = vmul.f32 %v310, %v333
  %v358 = vmul.f32 %v313, %v337
  %v359 = vmul.f32 %v316, %v337
  %v360 = vmul.f32 %v319, %v341
  %v361 = vmul.f32 %v322, %v341
  %362 = vset.pattern.permute.xlu0 3
  %363 = vperm.xlu0 %362, %v104
  %v364 = vpop.permute.xlu0 %363
  %v365 = vlaneseq
  %v366 = vshrl.u32 %v365, 7
  %v367 = vsub.s32 0, %v366
  %v368 = vrot.slane %v364, %v367
  %v369 = vlaneseq
  %v370 = vshrl.u32 %v369, 7
  %v371 = vsub.s32 1, %v370
  %v372 = vrot.slane %v364, %v371
  %v373 = vlaneseq
  %v374 = vshrl.u32 %v373, 7
  %v375 = vsub.s32 2, %v374
  %v376 = vrot.slane %v364, %v375
  %v377 = vlaneseq
  %v378 = vshrl.u32 %v377, 7
  %v379 = vsub.s32 3, %v378
  %v380 = vrot.slane %v364, %v379
  %v385 = vadd.f32 %v346, %v368
  %v386 = vadd.f32 %v347, %v368
  %v387 = vadd.f32 %v348, %v372
  %v388 = vadd.f32 %v349, %v372
  %v389 = vadd.f32 %v350, %v376
  %v390 = vadd.f32 %v351, %v376
  %v391 = vadd.f32 %v352, %v380
  %v392 = vadd.f32 %v353, %v380
  %v393 = vadd.f32 %v354, %v368
  %v394 = vadd.f32 %v355, %v368
  %v395 = vadd.f32 %v356, %v372
  %v396 = vadd.f32 %v357, %v372
  %v397 = vadd.f32 %v358, %v376
  %v398 = vadd.f32 %v359, %v376
  %v399 = vadd.f32 %v360, %v380
  %v400 = vadd.f32 %v361, %v380
  %v401 = vmax.f32 %v385, 0.0
  %v402 = vmax.f32 %v386, 0.0
  %v403 = vmax.f32 %v387, 0.0
  %v404 = vmax.f32 %v388, 0.0
  %v405 = vmax.f32 %v389, 0.0
  %v406 = vmax.f32 %v390, 0.0
  %v407 = vmax.f32 %v391, 0.0
  %v408 = vmax.f32 %v392, 0.0
  %v409 = vmax.f32 %v393, 0.0
  %v410 = vmax.f32 %v394, 0.0
  %v411 = vmax.f32 %v395, 0.0
  %v412 = vmax.f32 %v396, 0.0
  %v413 = vmax.f32 %v397, 0.0
  %v414 = vmax.f32 %v398, 0.0
  %v415 = vmax.f32 %v399, 0.0
  %v416 = vmax.f32 %v400, 0.0
  %433 = vset.pattern.permute.xlu0 0
  %434 = vperm.xlu0 %433, %v401
  %v435 = vpop.permute.xlu0 %434
  %436 = vset.pattern.permute.xlu0 0
  %437 = vperm.xlu0 %436, %v402
  %v438 = vpop.permute.xlu0 %437
  %439 = vset.pattern.permute.xlu0 0
  %440 = vperm.xlu0 %439, %v403
  %v441 = vpop.permute.xlu0 %440
  %442 = vset.pattern.permute.xlu0 0
  %443 = vperm.xlu0 %442, %v404
  %v444 = vpop.permute.xlu0 %443
  %445 = vset.pattern.permute.xlu0 0
  %446 = vperm.xlu0 %445, %v405
  %v447 = vpop.permute.xlu0 %446
  %448 = vset.pattern.permute.xlu0 0
  %449 = vperm.xlu0 %448, %v406
  %v450 = vpop.permute.xlu0 %449
  %451 = vset.pattern.permute.xlu0 0
  %452 = vperm.xlu0 %451, %v407
  %v453 = vpop.permute.xlu0 %452
  %454 = vset.pattern.permute.xlu0 0
  %455 = vperm.xlu0 %454, %v408
  %v456 = vpop.permute.xlu0 %455
  %457 = vset.pattern.permute.xlu0 0
  %458 = vperm.xlu0 %457, %v409
  %v459 = vpop.permute.xlu0 %458
  %460 = vset.pattern.permute.xlu0 0
  %461 = vperm.xlu0 %460, %v410
  %v462 = vpop.permute.xlu0 %461
  %463 = vset.pattern.permute.xlu0 0
  %464 = vperm.xlu0 %463, %v411
  %v465 = vpop.permute.xlu0 %464
  %466 = vset.pattern.permute.xlu0 0
  %467 = vperm.xlu0 %466, %v412
  %v468 = vpop.permute.xlu0 %467
  %469 = vset.pattern.permute.xlu0 0
  %470 = vperm.xlu0 %469, %v413
  %v471 = vpop.permute.xlu0 %470
  %472 = vset.pattern.permute.xlu0 0
  %473 = vperm.xlu0 %472, %v414
  %v474 = vpop.permute.xlu0 %473
  %475 = vset.pattern.permute.xlu0 0
  %476 = vperm.xlu0 %475, %v415
  %v477 = vpop.permute.xlu0 %476
  %478 = vset.pattern.permute.xlu0 0
  %479 = vperm.xlu0 %478, %v416
  %v480 = vpop.permute.xlu0 %479
  %v481 = vlaneseq
  %v482 = vand.u32 %v481, 127
  %v483 = vlaneseq
  %v484 = vshrl.u32 %v483, 7
  %v485 = vsub.s32 %v482, %v484
  %v486 = vrot.slane %v435, %v485
  %v487 = vadd.s32 %v482, 4294967288
  %v488 = vlaneseq
  %v489 = vshrl.u32 %v488, 7
  %v490 = vsub.s32 %v487, %v489
  %v491 = vrot.slane %v438, %v490
  %vm492 = vcmask 130112
  %v493 = vsel %vm492, %v491, %v486
  %v494 = vlaneseq
  %v495 = vshrl.u32 %v494, 7
  %v496 = vsub.s32 %v482, %v495
  %v497 = vrot.slane %v441, %v496
  %v498 = vlaneseq
  %v499 = vshrl.u32 %v498, 7
  %v500 = vsub.s32 %v487, %v499
  %v501 = vrot.slane %v444, %v500
  %v502 = vsel %vm492, %v501, %v497
  %v503 = vlaneseq
  %v504 = vshrl.u32 %v503, 7
  %v505 = vsub.s32 %v482, %v504
  %v506 = vrot.slane %v447, %v505
  %v507 = vlaneseq
  %v508 = vshrl.u32 %v507, 7
  %v509 = vsub.s32 %v487, %v508
  %v510 = vrot.slane %v450, %v509
  %v511 = vsel %vm492, %v510, %v506
  %v512 = vlaneseq
  %v513 = vshrl.u32 %v512, 7
  %v514 = vsub.s32 %v482, %v513
  %v515 = vrot.slane %v453, %v514
  %v516 = vlaneseq
  %v517 = vshrl.u32 %v516, 7
  %v518 = vsub.s32 %v487, %v517
  %v519 = vrot.slane %v456, %v518
  %v520 = vsel %vm492, %v519, %v515
  %v521 = vlaneseq
  %v522 = vshrl.u32 %v521, 7
  %v523 = vsub.s32 %v482, %v522
  %v524 = vrot.slane %v459, %v523
  %v525 = vlaneseq
  %v526 = vshrl.u32 %v525, 7
  %v527 = vsub.s32 %v487, %v526
  %v528 = vrot.slane %v462, %v527
  %v529 = vsel %vm492, %v528, %v524
  %v530 = vlaneseq
  %v531 = vshrl.u32 %v530, 7
  %v532 = vsub.s32 %v482, %v531
  %v533 = vrot.slane %v465, %v532
  %v534 = vlaneseq
  %v535 = vshrl.u32 %v534, 7
  %v536 = vsub.s32 %v487, %v535
  %v537 = vrot.slane %v468, %v536
  %v538 = vsel %vm492, %v537, %v533
  %v539 = vlaneseq
  %v540 = vshrl.u32 %v539, 7
  %v541 = vsub.s32 %v482, %v540
  %v542 = vrot.slane %v471, %v541
  %v543 = vlaneseq
  %v544 = vshrl.u32 %v543, 7
  %v545 = vsub.s32 %v487, %v544
  %v546 = vrot.slane %v474, %v545
  %v547 = vsel %vm492, %v546, %v542
  %v548 = vlaneseq
  %v549 = vshrl.u32 %v548, 7
  %v550 = vsub.s32 %v482, %v549
  %v551 = vrot.slane %v477, %v550
  %v552 = vlaneseq
  %v553 = vshrl.u32 %v552, 7
  %v554 = vsub.s32 %v487, %v553
  %v555 = vrot.slane %v480, %v554
  %v556 = vsel %vm492, %v555, %v551
  %v565 = vmul.f32 %v231, %v493
  %v566 = vmul.f32 %v232, %v502
  %v567 = vmul.f32 %v233, %v511
  %v568 = vmul.f32 %v234, %v520
  %v569 = vmul.f32 %v235, %v529
  %v570 = vmul.f32 %v236, %v538
  %v571 = vmul.f32 %v237, %v547
  %v572 = vmul.f32 %v238, %v556
  %v581 = vrot.slane %v566, 7
  %vm582 = vcmask 1041409
  %v583 = vsel %vm582, %v581, %v565
  %v584 = vrot.slane %v567, 6
  %vm585 = vcmask 1042434
  %v586 = vsel %vm585, %v584, %v583
  %v587 = vrot.slane %v568, 5
  %vm588 = vcmask 1043459
  %v589 = vsel %vm588, %v587, %v586
  %v590 = vrot.slane %v570, 7
  %v591 = vsel %vm582, %v590, %v569
  %v592 = vrot.slane %v571, 6
  %v593 = vsel %vm585, %v592, %v591
  %v594 = vrot.slane %v572, 5
  %v595 = vsel %vm588, %v594, %v593
  %vm598 = vcmask 125952
  %v599 = vsel %vm598, %v589, 0.0
  %600 = vadd.xlane.f32.xlu0 %v599
  %v601 = vpop.xlane.xlu0 %600
  %v602 = vsel %vm598, %v595, 0.0
  %603 = vadd.xlane.f32.xlu0 %v602
  %v604 = vpop.xlane.xlu0 %603
  %v607 = vlaneseq
  %v608 = vshrl.u32 %v607, 7
  %v609 = vsub.s32 %v482, %v608
  %v610 = vrot.slane %v601, %v609
  %v611 = vlaneseq
  %v612 = vshrl.u32 %v611, 7
  %v613 = vsub.s32 %v482, %v612
  %v614 = vrot.slane %v604, %v613
  %v615 = vsel %vm582, %v614, %v610
  %vm617 = vcmask 25600
  %618 = vst.msk [vmem:[%s4] sm:$0x3] %vm617, %v615
  // Predicated region
  $region18: #{bndc_forward.2} parent=0 // pred_check
    _
  $region19: #{bndc_forward.2} parent=0 // pred_check_branch
    %620 = sbr.rel (0) target = $region21
  $region20: #{bndc_forward.2} parent=0 // pred_region
    _
  $region21: #{bndc_forward.2} parent=0 // pred_fallthru
    _
  // Predicated region
  $region22: #{bndc_forward.2} parent=0 // pred_check
    _
  $region23: #{bndc_forward.2} parent=0 // pred_check_branch
    %622 = sbr.rel (0) target = $region25
  $region24: #{bndc_forward.2} parent=0 // pred_region
    _
  $region25: #{bndc_forward.2} parent=0 // pred_fallthru
    _

// kernel: bndc_forward.3
$region0: #{bndc_forward.3}
  #allocation0 [shape = 'u32[]', space=smem, size = 0x4, offset = 0x4, fixed_abs, tag = 'smem constant byte address 0x4 - core index']
  #allocation1 [shape = 'u32[144,128]{1,0:T(1,128)}', space=vmem, size = 0x12000, scoped, tag = 'internal scratch']
  %s0 = inlined_call_operand.vmem [shape: f32[2,4,256], index: 0, kind: input, shape index: {}]
  %s1 = inlined_call_operand.vmem [shape: f32[2,4,1], index: 1, kind: input, shape index: {}]
  %s2 = inlined_call_operand.vmem [shape: f32[4,8], index: 2, kind: input, shape index: {}]
  %s3 = inlined_call_operand.vmem [shape: f32[2,4,256], index: 3, kind: output, shape index: {}]
  %s4 = sld [smem:[#allocation0]]
  $region45: #{bndc_forward.3} parent=0
    _
  %s6 = ssub.s32 1, %s4
  %s7 = scalar_select 0, %s6, %s4
  loop: start=0, step=1, limit=4
  $region2: #{bndc_forward.3} parent=0 // loop_pre_header
    _
  $region3: #{bndc_forward.3} parent=0 // loop_header
    %s9 = sphi 0, %s13
    %p10 = scmp.ge.s32.totalorder %s9, 4
    %s19 = sphi 0, %s21
    %s22 = sphi 0, %s19
    %s23 = sphi 0, %s22
    %s39 = sphi 0, %s23
    %s45 = sphi 0, %s47
    %s48 = sphi 0, %s45
    %s49 = sphi 0, %s48
    %s65 = sphi 0, %s49
    %s69 = sphi 0, %s69
    %s71 = sphi 0, %s69
    %s72 = sphi 0, %s71
    %s86 = sphi 0, %s72
    %s92 = sphi 0, %s94
    %s95 = sphi 0, %s92
    %s96 = sphi 0, %s95
    %s112 = sphi 0, %s96
  $region4: #{bndc_forward.3} parent=0 // loop_header_branch
    %12 = sbr.rel (%p10) target = $region8
  $region5: #{bndc_forward.3} parent=0 // loop_body
    %s14 = ssub.s32 %s9, 1
    %s15 = ssub.s32 %s9, 2
    %s16 = sadd.s32 %s9, 1
    %s17 = ssub.s32 %s9, %s16
    %p18 = scmp.eq.s32.totalorder %s17, 0
    %s20 = sadd.s32 %s19, 1
    %s21 = scalar_select %p18, %s19, %s20
    %p24 = pneg %p18
    %p25 = scmp.eq.s32.totalorder %s9, 1
    %p26 = por %p24, %p25
    %p27 = scmp.ne.s32.totalorder %s19, %s22
    %p28 = scmp.eq.s32.totalorder %s9, 0
    %p29 = por %p27, %p28
    %p30 = scmp.ne.s32.totalorder %s19, %s22
    %p31 = scmp.eq.s32.totalorder %s14, 1
    %p32 = por %p30, %p31
    %p33 = scmp.ne.s32.totalorder %s22, %s23
    %p34 = scmp.eq.s32.totalorder %s14, 0
    %p35 = por %p33, %p34
    %p36 = scmp.ne.s32.totalorder %s22, %s23
    %p37 = scmp.eq.s32.totalorder %s15, 1
    %p38 = por %p36, %p37
    %p40 = scmp.ne.s32.totalorder %s23, %s39
    %p41 = scmp.eq.s32.totalorder %s15, 0
    %p42 = por %p40, %p41
    %s43 = ssub.s32 %s9, %s16
    %p44 = scmp.eq.s32.totalorder %s43, 0
    %s46 = sadd.s32 %s45, 1
    %s47 = scalar_select %p44, %s45, %s46
    %p50 = pneg %p44
    %p51 = scmp.eq.s32.totalorder %s9, 1
    %p52 = por %p50, %p51
    %p53 = scmp.ne.s32.totalorder %s45, %s48
    %p54 = scmp.eq.s32.totalorder %s9, 0
    %p55 = por %p53, %p54
    %p56 = scmp.ne.s32.totalorder %s45, %s48
    %p57 = scmp.eq.s32.totalorder %s14, 1
    %p58 = por %p56, %p57
    %p59 = scmp.ne.s32.totalorder %s48, %s49
    %p60 = scmp.eq.s32.totalorder %s14, 0
    %p61 = por %p59, %p60
    %p62 = scmp.ne.s32.totalorder %s48, %s49
    %p63 = scmp.eq.s32.totalorder %s15, 1
    %p64 = por %p62, %p63
    %p66 = scmp.ne.s32.totalorder %s49, %s65
    %p67 = scmp.eq.s32.totalorder %s15, 0
    %p68 = por %p66, %p67
    %s70 = sadd.s32 %s69, 1
    %p73 = scmp.eq.s32.totalorder %s9, 1
    %p74 = scmp.ne.s32.totalorder %s69, %s71
    %p75 = scmp.eq.s32.totalorder %s9, 0
    %p76 = por %p74, %p75
    %p77 = scmp.ne.s32.totalorder %s69, %s71
    %p78 = scmp.eq.s32.totalorder %s14, 1
    %p79 = por %p77, %p78
    %p80 = scmp.ne.s32.totalorder %s71, %s72
    %p81 = scmp.eq.s32.totalorder %s14, 0
    %p82 = por %p80, %p81
    %p83 = scmp.ne.s32.totalorder %s71, %s72
    %p84 = scmp.eq.s32.totalorder %s15, 1
    %p85 = por %p83, %p84
    %p87 = scmp.ne.s32.totalorder %s72, %s86
    %p88 = scmp.eq.s32.totalorder %s15, 0
    %p89 = por %p87, %p88
    %s90 = ssub.s32 %s9, %s16
    %p91 = scmp.eq.s32.totalorder %s90, 0
    %s93 = sadd.s32 %s92, 1
    %s94 = scalar_select %p91, %s92, %s93
    %p97 = pneg %p91
    %p98 = scmp.eq.s32.totalorder %s9, 1
    %p99 = por %p97, %p98
    %p100 = scmp.ne.s32.totalorder %s92, %s95
    %p101 = scmp.eq.s32.totalorder %s9, 0
    %p102 = por %p100, %p101
    %p103 = scmp.ne.s32.totalorder %s92, %s95
    %p104 = scmp.eq.s32.totalorder %s14, 1
    %p105 = por %p103, %p104
    %p106 = scmp.ne.s32.totalorder %s95, %s96
    %p107 = scmp.eq.s32.totalorder %s14, 0
    %p108 = por %p106, %p107
    %p109 = scmp.ne.s32.totalorder %s95, %s96
    %p110 = scmp.eq.s32.totalorder %s15, 1
    %p111 = por %p109, %p110
    %p113 = scmp.ne.s32.totalorder %s96, %s112
    %p114 = scmp.eq.s32.totalorder %s15, 0
    %p115 = por %p113, %p114
    %p116 = scmp.le.s32.totalorder 1, %s9
    %p117 = scmp.lt.s32.totalorder %s9, 3
    %p118 = pnand %p116, %p117
    %p119 = pneg %p118
    // Predicated region
    $region9: #{bndc_forward.3} parent=5 // pred_check
      _
    $region10: #{bndc_forward.3} parent=5 // pred_check_branch
      %121 = sbr.rel (%p118) target = $region12
    $region11: #{bndc_forward.3} parent=5 // pred_region
      %s122 = ssub.s32 %s9, 1
      // Predicated region
      $region13: #{bndc_forward.3} parent=11 // pred_check
        %p123 = pneg %p82
      $region14: #{bndc_forward.3} parent=11 // pred_check_branch
        %125 = sbr.rel (%p123) target = $region16
      $region15: #{bndc_forward.3} parent=11 // pred_region
        _
      $region16: #{bndc_forward.3} parent=11 // pred_fallthru
        _
    $region12: #{bndc_forward.3} parent=5 // pred_fallthru
      _
    %p126 = scmp.lt.s32.totalorder %s9, 2
    // Predicated region
    $region17: #{bndc_forward.3} parent=5 // pred_check
      %p127 = pneg %p126
    $region18: #{bndc_forward.3} parent=5 // pred_check_branch
      %129 = sbr.rel (%p127) target = $region20
    $region19: #{bndc_forward.3} parent=5 // pred_region
      // Predicated region
      $region21: #{bndc_forward.3} parent=19 // pred_check
        %p130 = pneg %p29
      $region22: #{bndc_forward.3} parent=19 // pred_check_branch
        %132 = sbr.rel (%p130) target = $region24
      $region23: #{bndc_forward.3} parent=19 // pred_region
        %p133 = scmp.lt.s32.totalorder %s9, 1
        %s134 = scalar_select %p133, %s9, 1
        %s135 = smul.addr %s134, 2
        %s136 = smul.addr %s135, 4
        %s137 = scalar_lea.vmem %s0, %s136
      $region24: #{bndc_forward.3} parent=19 // pred_fallthru
        _
      // Predicated region
      $region25: #{bndc_forward.3} parent=19 // pred_check
        %p138 = pneg %p55
      $region26: #{bndc_forward.3} parent=19 // pred_check_branch
        %140 = sbr.rel (%p138) target = $region28
      $region27: #{bndc_forward.3} parent=19 // pred_region
        %p141 = scmp.lt.s32.totalorder %s9, 1
        %s142 = scalar_select %p141, %s9, 1
        %s143 = smul.addr %s142, 4
        %s144 = scalar_lea.vmem %s1, %s143
      $region28: #{bndc_forward.3} parent=19 // pred_fallthru
        _
    $region20: #{bndc_forward.3} parent=5 // pred_fallthru
      _
    %p145 = scmp.le.s32.totalorder 1, %s9
    %p146 = scmp.lt.s32.totalorder %s9, 3
    %p147 = pnand %p145, %p146
    %p148 = pneg %p147
    // Predicated region
    $region29: #{bndc_forward.3} parent=5 // pred_check
      _
    $region30: #{bndc_forward.3} parent=5 // pred_check_branch
      %150 = sbr.rel (%p147) target = $region32
    $region31: #{bndc_forward.3} parent=5 // pred_region
      %s151 = ssub.s32 %s9, 1
      %p152 = scmp.lt.s32.totalorder %s14, 1
      %s153 = scalar_select %p152, %s14, 1
      %s154 = smul.addr %s153, 2
      %s155 = smul.addr %s154, 4
      %s156 = scalar_lea.vmem %s0, %s155
      %p157 = pneg %p35
      %p158 = pneg %p32
      %p159 = scmp.lt.s32.totalorder %s14, 1
      %s160 = scalar_select %p159, %s14, 1
      %s161 = smul.addr %s160, 4
      %s162 = scalar_lea.vmem %s1, %s161
      %p163 = pneg %p61
      %p164 = pneg %p58
      %p165 = pneg %p82
      %p166 = pneg %p79
      %p167 = pneg %p108
      %p168 = pneg %p105
      %p169 = scmp.lt.s32.totalorder %s14, 1
      %s170 = scalar_select %p169, %s14, 1
      %s171 = smul.addr %s170, 2
      %s172 = smul.addr %s171, 4
      %s173 = scalar_lea.vmem %s3, %s172
      %p174 = scmp.lt.s32.totalorder %s14, 1
      %s175 = scalar_select %p174, %s14, 1
      %s176 = smul.addr %s175, 2
      %s177 = smul.addr %s176, 4
      %s178 = scalar_lea.vmem %s0, %s177
      %p179 = scmp.lt.s32.totalorder %s14, 1
      %s180 = scalar_select %p179, %s14, 1
      %s181 = smul.addr %s180, 4
      %s182 = scalar_lea.vmem %s1, %s181
      %p183 = scmp.lt.s32.totalorder %s14, 1
      %s184 = scalar_select %p183, %s14, 1
      %s185 = smul.addr %s184, 2
      %s186 = smul.addr %s185, 4
      %s187 = scalar_lea.vmem %s3, %s186
      %v188 = vld [vmem:[%s2] sm:$0xf]
      %v189 = vld [vmem:[%s178] sm:$0xff]
      %v190 = vld [vmem:[%s182] sm:$0xf]
      %192 = vset.pattern.permute.xlu0 2
      %193 = vperm.xlu0 %192, %v188
      %v194 = vpop.permute.xlu0 %193
      %v196 = vunpack.c.l.s4 839922192
      %v197 = vunpack.c.0.s8 %v196
      %v198 = vlaneseq
      %v199 = vshrl.u32 %v198, 7
      %v200 = vsub.s32 %v197, %v199
      %v201 = vrot.slane %v194, %v200
      %v203 = vmul.f32 %v189, %v201
      %204 = vset.pattern.permute.xlu0 3
      %205 = vperm.xlu0 %204, %v188
      %v206 = vpop.permute.xlu0 %205
      %v208 = vunpack.c.l.s4 839922192
      %v209 = vunpack.c.0.s8 %v208
      %v210 = vlaneseq
      %v211 = vshrl.u32 %v210, 7
      %v212 = vsub.s32 %v209, %v211
      %v213 = vrot.slane %v206, %v212
      %v215 = vadd.f32 %v203, %v213
      %216 = vset.pattern.permute.xlu0 4
      %217 = vperm.xlu0 %216, %v188
      %v218 = vpop.permute.xlu0 %217
      %v220 = vunpack.c.l.s4 839922192
      %v221 = vunpack.c.0.s8 %v220
      %v222 = vlaneseq
      %v223 = vshrl.u32 %v222, 7
      %v224 = vsub.s32 %v221, %v223
      %v225 = vrot.slane %v218, %v224
      %v227 = vmul.f32 %v189, %v225
      %228 = vset.pattern.permute.xlu0 5
      %229 = vperm.xlu0 %228, %v188
      %v230 = vpop.permute.xlu0 %229
      %v232 = vunpack.c.l.s4 839922192
      %v233 = vunpack.c.0.s8 %v232
      %v234 = vlaneseq
      %v235 = vshrl.u32 %v234, 7
      %v236 = vsub.s32 %v233, %v235
      %v237 = vrot.slane %v230, %v236
      %v239 = vadd.f32 %v227, %v237
      %240 = vset.pattern.permute.xlu0 0
      %241 = vperm.xlu0 %240, %v188
      %v242 = vpop.permute.xlu0 %241
      %v244 = vunpack.c.l.s4 839922192
      %v245 = vunpack.c.0.s8 %v244
      %v246 = vlaneseq
      %v247 = vshrl.u32 %v246, 7
      %v248 = vsub.s32 %v245, %v247
      %v249 = vrot.slane %v242, %v248
      %v251 = vmul.f32 %v189, %v249
      %252 = vset.pattern.permute.xlu0 1
      %253 = vperm.xlu0 %252, %v188
      %v254 = vpop.permute.xlu0 %253
      %v256 = vunpack.c.l.s4 839922192
      %v257 = vunpack.c.0.s8 %v256
      %v258 = vlaneseq
      %v259 = vshrl.u32 %v258, 7
      %v260 = vsub.s32 %v257, %v259
      %v261 = vrot.slane %v254, %v260
      %v263 = vadd.f32 %v251, %v261
      %v265 = vcombine.high %v239, %v239
      %267 = vxpose.xlu0.b32.start [1/16] %v239, 128
      %268 = vxpose.xlu0.b32.cont [2/16] 0.0, 128
      %269 = vxpose.xlu0.b32.cont [3/16] 0.0, 128
      %270 = vxpose.xlu0.b32.cont [4/16] 0.0, 128
      %271 = vxpose.xlu0.b32.cont [5/16] 0.0, 128
      %272 = vxpose.xlu0.b32.cont [6/16] 0.0, 128
      %273 = vxpose.xlu0.b32.cont [7/16] 0.0, 128
      %274 = vxpose.xlu0.b32.cont [8/16] 0.0, 128
      %275 = vxpose.xlu0.b32.cont [9/16] 0.0, 128
      %276 = vxpose.xlu0.b32.cont [10/16] 0.0, 128
      %277 = vxpose.xlu0.b32.cont [11/16] 0.0, 128
      %278 = vxpose.xlu0.b32.cont [12/16] 0.0, 128
      %279 = vxpose.xlu0.b32.cont [13/16] 0.0, 128
      %280 = vxpose.xlu0.b32.cont [14/16] 0.0, 128
      %281 = vxpose.xlu0.b32.cont [15/16] 0.0, 128
      %282 = vxpose.xlu0.b32.end [16/16] 0.0, 128
      %v283 = vpop.trf.xlu0
      %v284 = vpop.trf.xlu0
      %v285 = vpop.trf.xlu0
      %v286 = vpop.trf.xlu0
      %v287 = vpop.trf.xlu0
      %v288 = vpop.trf.xlu0
      %v289 = vpop.trf.xlu0
      %v290 = vpop.trf.xlu0
      %v291 = vpop.trf.xlu0
      %v292 = vpop.trf.xlu0
      %v293 = vpop.trf.xlu0
      %v294 = vpop.trf.xlu0
      %v295 = vpop.trf.xlu0
      %v296 = vpop.trf.xlu0
      %v297 = vpop.trf.xlu0
      %v298 = vpop.trf.xlu0
      %299 = vxpose.xlu0.b32.start [1/16] %v265, 128
      %300 = vxpose.xlu0.b32.cont [2/16] 0.0, 128
      %301 = vxpose.xlu0.b32.cont [3/16] 0.0, 128
      %302 = vxpose.xlu0.b32.cont [4/16] 0.0, 128
      %303 = vxpose.xlu0.b32.cont [5/16] 0.0, 128
      %304 = vxpose.xlu0.b32.cont [6/16] 0.0, 128
      %305 = vxpose.xlu0.b32.cont [7/16] 0.0, 128
      %306 = vxpose.xlu0.b32.cont [8/16] 0.0, 128
      %307 = vxpose.xlu0.b32.cont [9/16] 0.0, 128
      %308 = vxpose.xlu0.b32.cont [10/16] 0.0, 128
      %309 = vxpose.xlu0.b32.cont [11/16] 0.0, 128
      %310 = vxpose.xlu0.b32.cont [12/16] 0.0, 128
      %311 = vxpose.xlu0.b32.cont [13/16] 0.0, 128
      %312 = vxpose.xlu0.b32.cont [14/16] 0.0, 128
      %313 = vxpose.xlu0.b32.cont [15/16] 0.0, 128
      %314 = vxpose.xlu0.b32.end [16/16] 0.0, 128
      %v315 = vpop.trf.xlu0
      %v316 = vpop.trf.xlu0
      %v317 = vpop.trf.xlu0
      %v318 = vpop.trf.xlu0
      %v319 = vpop.trf.xlu0
      %v320 = vpop.trf.xlu0
      %v321 = vpop.trf.xlu0
      %v322 = vpop.trf.xlu0
      %v323 = vpop.trf.xlu0
      %v324 = vpop.trf.xlu0
      %v325 = vpop.trf.xlu0
      %v326 = vpop.trf.xlu0
      %v327 = vpop.trf.xlu0
      %v328 = vpop.trf.xlu0
      %v329 = vpop.trf.xlu0
      %v330 = vpop.trf.xlu0
      %v332 = vcombine.high %v215, %v215
      %vm333 = vcmask 31744
      %v335 = vsel %vm333, %v283, 0
      %v338 = vsel %vm333, %v284, 0
      %v341 = vsel %vm333, %v285, 0
      %v344 = vsel %vm333, %v286, 0
      %v347 = vsel %vm333, %v287, 0
      %v350 = vsel %vm333, %v288, 0
      %v353 = vsel %vm333, %v289, 0
      %v356 = vsel %vm333, %v290, 0
      %v359 = vsel %vm333, %v291, 0
      %v362 = vsel %vm333, %v292, 0
      %v365 = vsel %vm333, %v293, 0
      %v368 = vsel %vm333, %v294, 0
      %v371 = vsel %vm333, %v295, 0
      %v374 = vsel %vm333, %v296, 0
      %v377 = vsel %vm333, %v297, 0
      %v380 = vsel %vm333, %v298, 0
      %v383 = vsel %vm333, %v315, 0
      %v386 = vsel %vm333, %v316, 0
      %v389 = vsel %vm333, %v317, 0
      %v392 = vsel %vm333, %v318, 0
      %v395 = vsel %vm333, %v319, 0
      %v398 = vsel %vm333, %v320, 0
      %v401 = vsel %vm333, %v321, 0
      %v404 = vsel %vm333, %v322, 0
      %v407 = vsel %vm333, %v323, 0
      %v410 = vsel %vm333, %v324, 0
      %v413 = vsel %vm333, %v325, 0
      %v416 = vsel %vm333, %v326, 0
      %v419 = vsel %vm333, %v327, 0
      %v422 = vsel %vm333, %v328, 0
      %v425 = vsel %vm333, %v329, 0
      %v428 = vsel %vm333, %v330, 0
      %vm430 = vcmask 1043456
      %v431 = vsel %vm430, %v215, 0
      %v433 = vsel %vm430, %v332, 0
      %435 = vmatprep.subr.mxu0 %v433
      %436 = vmatpush1.msra.mxu0 %v431
      %437 = vmatprep.subr.mxu0 0.0
      %438 = vmatpush1.msra.mxu0 0.0
      %439 = vmatprep.subr.mxu0 0.0
      %440 = vmatpush1.msra.mxu0 0.0
      %441 = vmatprep.subr.mxu0 0.0
      %442 = vmatpush1.msra.mxu0 0.0
      %443 = vmatprep.subr.mxu0 0.0
      %444 = vmatpush1.msra.mxu0 0.0
      %445 = vmatprep.subr.mxu0 0.0
      %446 = vmatpush1.msra.mxu0 0.0
      %447 = vmatprep.subr.mxu0 0.0
      %448 = vmatpush1.msra.mxu0 0.0
      %449 = vmatprep.subr.mxu0 0.0
      %450 = vmatpush1.msra.mxu0 0.0
      %451 = vmatprep.subr.mxu0 0.0
      %452 = vmatpush1.msra.mxu0 0.0
      %453 = vmatprep.subr.mxu0 0.0
      %454 = vmatpush1.msra.mxu0 0.0
      %455 = vmatprep.subr.mxu0 0.0
      %456 = vmatpush1.msra.mxu0 0.0
      %457 = vmatprep.subr.mxu0 0.0
      %458 = vmatpush1.msra.mxu0 0.0
      %459 = vmatprep.subr.mxu0 0.0
      %460 = vmatpush1.msra.mxu0 0.0
      %461 = vmatprep.subr.mxu0 0.0
      %462 = vmatpush1.msra.mxu0 0.0
      %463 = vmatprep.subr.mxu0 0.0
      %464 = vmatpush1.msra.mxu0 0.0
      %465 = vmatprep.subr.mxu0 0.0
      %466 = vmatpush1.msra.mxu0 0.0
      %467 = vmatprep.subr.mxu0 0.0
      %468 = vmatpush1.msra.mxu0 0.0
      %469 = vmatprep.subr.mxu0 0.0
      %470 = vmatpush1.msra.mxu0 0.0
      %471 = vmatprep.subr.mxu0 0.0
      %472 = vmatpush1.msra.mxu0 0.0
      %473 = vmatprep.subr.mxu0 0.0
      %474 = vmatpush1.msra.mxu0 0.0
      %475 = vmatprep.subr.mxu0 0.0
      %476 = vmatpush1.msra.mxu0 0.0
      %477 = vmatprep.subr.mxu0 0.0
      %478 = vmatpush1.msra.mxu0 0.0
      %479 = vmatprep.subr.mxu0 0.0
      %480 = vmatpush1.msra.mxu0 0.0
      %481 = vmatprep.subr.mxu0 0.0
      %482 = vmatpush1.msra.mxu0 0.0
      %483 = vmatprep.subr.mxu0 0.0
      %484 = vmatpush1.msra.mxu0 0.0
      %485 = vmatprep.subr.mxu0 0.0
      %486 = vmatpush1.msra.mxu0 0.0
      %487 = vmatprep.subr.mxu0 0.0
      %488 = vmatpush1.msra.mxu0 0.0
      %489 = vmatprep.subr.mxu0 0.0
      %490 = vmatpush1.msra.mxu0 0.0
      %491 = vmatprep.subr.mxu0 0.0
      %492 = vmatpush1.msra.mxu0 0.0
      %493 = vmatprep.subr.mxu0 0.0
      %494 = vmatpush1.msra.mxu0 0.0
      %495 = vmatprep.subr.mxu0 0.0
      %496 = vmatpush1.msra.mxu0 0.0
      %497 = vmatprep.subr.mxu0 0.0
      %498 = vmatpush1.msra.mxu0 0.0
      %499 = vmatprep.mubr.f32.mxu0 0.0
      %500 = vmatmul.mubr.f32.gmra.mrb[0].mxu0 %v335
      %v501 = vpop.f32.mrb[0].mxu0
      %v502 = vadd.f32 0.0, %v501
      %v503 = vpop.f32.mrb[0].mxu0
      %v504 = vadd.f32 0.0, %v503
      %505 = vmatprep.mubr.f32.mxu0 0.0
      %506 = vmatmul.mubr.f32.gmra.mrb[0].mxu0 %v338
      %v507 = vpop.f32.mrb[0].mxu0
      %v508 = vadd.f32 0.0, %v507
      %v509 = vpop.f32.mrb[0].mxu0
      %v510 = vadd.f32 0.0, %v509
      %511 = vmatprep.mubr.f32.mxu0 0.0
      %512 = vmatmul.mubr.f32.gmra.mrb[0].mxu0 %v341
      %v513 = vpop.f32.mrb[0].mxu0
      %v514 = vadd.f32 0.0, %v513
      %v515 = vpop.f32.mrb[0].mxu0
      %v516 = vadd.f32 0.0, %v515
      %517 = vmatprep.mubr.f32.mxu0 0.0
      %518 = vmatmul.mubr.f32.gmra.mrb[0].mxu0 %v344
      %v519 = vpop.f32.mrb[0].mxu0
      %v520 = vadd.f32 0.0, %v519
      %v521 = vpop.f32.mrb[0].mxu0
      %v522 = vadd.f32 0.0, %v521
      %523 = vmatprep.mubr.f32.mxu0 0.0
      %524 = vmatmul.mubr.f32.gmra.mrb[0].mxu0 %v347
      %v525 = vpop.f32.mrb[0].mxu0
      %v526 = vadd.f32 0.0, %v525
      %v527 = vpop.f32.mrb[0].mxu0
      %v528 = vadd.f32 0.0, %v527
      %529 = vmatprep.mubr.f32.mxu0 0.0
      %530 = vmatmul.mubr.f32.gmra.mrb[0].mxu0 %v350
      %v531 = vpop.f32.mrb[0].mxu0
      %v532 = vadd.f32 0.0, %v531
      %v533 = vpop.f32.mrb[0].mxu0
      %v534 = vadd.f32 0.0, %v533
      %535 = vmatprep.mubr.f32.mxu0 0.0
      %536 = vmatmul.mubr.f32.gmra.mrb[0].mxu0 %v353
      %v537 = vpop.f32.mrb[0].mxu0
      %v538 = vadd.f32 0.0, %v537
      %v539 = vpop.f32.mrb[0].mxu0
      %v540 = vadd.f32 0.0, %v539
      %541 = vmatprep.mubr.f32.mxu0 0.0
      %542 = vmatmul.mubr.f32.gmra.mrb[0].mxu0 %v356
      %v543 = vpop.f32.mrb[0].mxu0
      %v544 = vadd.f32 0.0, %v543
      %v545 = vpop.f32.mrb[0].mxu0
      %v546 = vadd.f32 0.0, %v545
      %547 = vmatprep.mubr.f32.mxu0 0.0
      %548 = vmatmul.mubr.f32.gmra.mrb[0].mxu0 %v359
      %v549 = vpop.f32.mrb[0].mxu0
      %v550 = vadd.f32 0.0, %v549
      %v551 = vpop.f32.mrb[0].mxu0
      %v552 = vadd.f32 0.0, %v551
      %553 = vmatprep.mubr.f32.mxu0 0.0
      %554 = vmatmul.mubr.f32.gmra.mrb[0].mxu0 %v362
      %v555 = vpop.f32.mrb[0].mxu0
      %v556 = vadd.f32 0.0, %v555
      %v557 = vpop.f32.mrb[0].mxu0
      %v558 = vadd.f32 0.0, %v557
      %559 = vmatprep.mubr.f32.mxu0 0.0
      %560 = vmatmul.mubr.f32.gmra.mrb[0].mxu0 %v365
      %v561 = vpop.f32.mrb[0].mxu0
      %v562 = vadd.f32 0.0, %v561
      %v563 = vpop.f32.mrb[0].mxu0
      %v564 = vadd.f32 0.0, %v563
      %565 = vmatprep.mubr.f32.mxu0 0.0
      %566 = vmatmul.mubr.f32.gmra.mrb[0].mxu0 %v368
      %v567 = vpop.f32.mrb[0].mxu0
      %v568 = vadd.f32 0.0, %v567
      %v569 = vpop.f32.mrb[0].mxu0
      %v570 = vadd.f32 0.0, %v569
      %571 = vmatprep.mubr.f32.mxu0 0.0
      %572 = vmatmul.mubr.f32.gmra.mrb[0].mxu0 %v371
      %v573 = vpop.f32.mrb[0].mxu0
      %v574 = vadd.f32 0.0, %v573
      %v575 = vpop.f32.mrb[0].mxu0
      %v576 = vadd.f32 0.0, %v575
      %577 = vmatprep.mubr.f32.mxu0 0.0
      %578 = vmatmul.mubr.f32.gmra.mrb[0].mxu0 %v374
      %v579 = vpop.f32.mrb[0].mxu0
      %v580 = vadd.f32 0.0, %v579
      %v581 = vpop.f32.mrb[0].mxu0
      %v582 = vadd.f32 0.0, %v581
      %583 = vmatprep.mubr.f32.mxu0 0.0
      %584 = vmatmul.mubr.f32.gmra.mrb[0].mxu0 %v377
      %v585 = vpop.f32.mrb[0].mxu0
      %v586 = vadd.f32 0.0, %v585
      %v587 = vpop.f32.mrb[0].mxu0
      %v588 = vadd.f32 0.0, %v587
      %589 = vmatprep.mubr.f32.mxu0 0.0
      %590 = vmatmul.mubr.f32.gmra.mrb[0].mxu0 %v380
      %v591 = vpop.f32.mrb[0].mxu0
      %v592 = vadd.f32 0.0, %v591
      %v593 = vpop.f32.mrb[0].mxu0
      %v594 = vadd.f32 0.0, %v593
      %595 = vmatprep.mubr.f32.mxu0 0.0
      %596 = vmatmul.mubr.f32.gmra.mrb[0].mxu0 %v383
      %v597 = vpop.f32.mrb[0].mxu0
      %v598 = vadd.f32 0.0, %v597
      %v599 = vpop.f32.mrb[0].mxu0
      %v600 = vadd.f32 0.0, %v599
      %601 = vmatprep.mubr.f32.mxu0 0.0
      %602 = vmatmul.mubr.f32.gmra.mrb[0].mxu0 %v386
      %v603 = vpop.f32.mrb[0].mxu0
      %v604 = vadd.f32 0.0, %v603
      %v605 = vpop.f32.mrb[0].mxu0
      %v606 = vadd.f32 0.0, %v605
      %607 = vmatprep.mubr.f32.mxu0 0.0
      %608 = vmatmul.mubr.f32.gmra.mrb[0].mxu0 %v389
      %v609 = vpop.f32.mrb[0].mxu0
      %v610 = vadd.f32 0.0, %v609
      %v611 = vpop.f32.mrb[0].mxu0
      %v612 = vadd.f32 0.0, %v611
      %613 = vmatprep.mubr.f32.mxu0 0.0
      %614 = vmatmul.mubr.f32.gmra.mrb[0].mxu0 %v392
      %v615 = vpop.f32.mrb[0].mxu0
      %v616 = vadd.f32 0.0, %v615
      %v617 = vpop.f32.mrb[0].mxu0
      %v618 = vadd.f32 0.0, %v617
      %619 = vmatprep.mubr.f32.mxu0 0.0
      %620 = vmatmul.mubr.f32.gmra.mrb[0].mxu0 %v395
      %v621 = vpop.f32.mrb[0].mxu0
      %v622 = vadd.f32 0.0, %v621
      %v623 = vpop.f32.mrb[0].mxu0
      %v624 = vadd.f32 0.0, %v623
      %625 = vmatprep.mubr.f32.mxu0 0.0
      %626 = vmatmul.mubr.f32.gmra.mrb[0].mxu0 %v398
      %v627 = vpop.f32.mrb[0].mxu0
      %v628 = vadd.f32 0.0, %v627
      %v629 = vpop.f32.mrb[0].mxu0
      %v630 = vadd.f32 0.0, %v629
      %631 = vmatprep.mubr.f32.mxu0 0.0
      %632 = vmatmul.mubr.f32.gmra.mrb[0].mxu0 %v401
      %v633 = vpop.f32.mrb[0].mxu0
      %v634 = vadd.f32 0.0, %v633
      %v635 = vpop.f32.mrb[0].mxu0
      %v636 = vadd.f32 0.0, %v635
      %637 = vmatprep.mubr.f32.mxu0 0.0
      %638 = vmatmul.mubr.f32.gmra.mrb[0].mxu0 %v404
      %v639 = vpop.f32.mrb[0].mxu0
      %v640 = vadd.f32 0.0, %v639
      %v641 = vpop.f32.mrb[0].mxu0
      %v642 = vadd.f32 0.0, %v641
      %643 = vmatprep.mubr.f32.mxu0 0.0
      %644 = vmatmul.mubr.f32.gmra.mrb[0].mxu0 %v407
      %v645 = vpop.f32.mrb[0].mxu0
      %v646 = vadd.f32 0.0, %v645
      %v647 = vpop.f32.mrb[0].mxu0
      %v648 = vadd.f32 0.0, %v647
      %649 = vmatprep.mubr.f32.mxu0 0.0
      %650 = vmatmul.mubr.f32.gmra.mrb[0].mxu0 %v410
      %v651 = vpop.f32.mrb[0].mxu0
      %v652 = vadd.f32 0.0, %v651
      %v653 = vpop.f32.mrb[0].mxu0
      %v654 = vadd.f32 0.0, %v653
      %655 = vmatprep.mubr.f32.mxu0 0.0
      %656 = vmatmul.mubr.f32.gmra.mrb[0].mxu0 %v413
      %v657 = vpop.f32.mrb[0].mxu0
      %v658 = vadd.f32 0.0, %v657
      %v659 = vpop.f32.mrb[0].mxu0
      %v660 = vadd.f32 0.0, %v659
      %661 = vmatprep.mubr.f32.mxu0 0.0
      %662 = vmatmul.mubr.f32.gmra.mrb[0].mxu0 %v416
      %v663 = vpop.f32.mrb[0].mxu0
      %v664 = vadd.f32 0.0, %v663
      %v665 = vpop.f32.mrb[0].mxu0
      %v666 = vadd.f32 0.0, %v665
      %667 = vmatprep.mubr.f32.mxu0 0.0
      %668 = vmatmul.mubr.f32.gmra.mrb[0].mxu0 %v419
      %v669 = vpop.f32.mrb[0].mxu0
      %v670 = vadd.f32 0.0, %v669
      %v671 = vpop.f32.mrb[0].mxu0
      %v672 = vadd.f32 0.0, %v671
      %673 = vmatprep.mubr.f32.mxu0 0.0
      %674 = vmatmul.mubr.f32.gmra.mrb[0].mxu0 %v422
      %v675 = vpop.f32.mrb[0].mxu0
      %v676 = vadd.f32 0.0, %v675
      %v677 = vpop.f32.mrb[0].mxu0
      %v678 = vadd.f32 0.0, %v677
      %679 = vmatprep.mubr.f32.mxu0 0.0
      %680 = vmatmul.mubr.f32.gmra.mrb[0].mxu0 %v425
      %v681 = vpop.f32.mrb[0].mxu0
      %v682 = vadd.f32 0.0, %v681
      %v683 = vpop.f32.mrb[0].mxu0
      %v684 = vadd.f32 0.0, %v683
      %685 = vmatprep.mubr.f32.mxu0 0.0
      %686 = vmatmul.mubr.f32.gmra.mrb[0].mxu0 %v428
      %v687 = vpop.f32.mrb[0].mxu0
      %v688 = vadd.f32 0.0, %v687
      %v689 = vpop.f32.mrb[0].mxu0
      %v690 = vadd.f32 0.0, %v689
      %691 = vdwg.mxu0
      %v692 = vmax.f32 %v502, %v514
      %v693 = vmax.f32 %v508, %v520
      %v694 = vmax.f32 %v692, %v526
      %v695 = vmax.f32 %v693, %v532
      %v696 = vmax.f32 %v694, %v538
      %v697 = vmax.f32 %v695, %v544
      %v698 = vmax.f32 %v696, %v550
      %v699 = vmax.f32 %v697, %v556
      %v700 = vmax.f32 %v698, %v562
      %v701 = vmax.f32 %v699, %v568
      %v702 = vmax.f32 %v700, %v574
      %v703 = vmax.f32 %v701, %v580
      %v704 = vmax.f32 %v702, %v586
      %v705 = vmax.f32 %v703, %v592
      %v706 = vmax.f32 %v704, %v598
      %v707 = vmax.f32 %v705, %v604
      %v708 = vmax.f32 %v706, %v610
      %v709 = vmax.f32 %v707, %v616
      %v710 = vmax.f32 %v708, %v622
      %v711 = vmax.f32 %v709, %v628
      %v712 = vmax.f32 %v710, %v634
      %v713 = vmax.f32 %v711, %v640
      %v714 = vmax.f32 %v712, %v646
      %v715 = vmax.f32 %v713, %v652
      %v716 = vmax.f32 %v714, %v658
      %v717 = vmax.f32 %v715, %v664
      %v718 = vmax.f32 %v716, %v670
      %v719 = vmax.f32 %v717, %v676
      %v720 = vmax.f32 %v718, %v682
      %v721 = vmax.f32 %v719, %v688
      %v722 = vmax.f32 %v720, %v721
      %v723 = vrot.slane %v722, 4
      %v724 = vmax.f32 %v722, %v723
      %v725 = vrot.slane %v724, 2
      %v726 = vmax.f32 %v724, %v725
      %v727 = vrot.slane %v726, 1
      %v728 = vmax.f32 %v726, %v727
      %v729 = vmax.f32 %v504, %v516
      %v730 = vmax.f32 %v510, %v522
      %v731 = vmax.f32 %v729, %v528
      %v732 = vmax.f32 %v730, %v534
      %v733 = vmax.f32 %v731, %v540
      %v734 = vmax.f32 %v732, %v546
      %v735 = vmax.f32 %v733, %v552
      %v736 = vmax.f32 %v734, %v558
      %v737 = vmax.f32 %v735, %v564
      %v738 = vmax.f32 %v736, %v570
      %v739 = vmax.f32 %v737, %v576
      %v740 = vmax.f32 %v738, %v582
      %v741 = vmax.f32 %v739, %v588
      %v742 = vmax.f32 %v740, %v594
      %v743 = vmax.f32 %v741, %v600
      %v744 = vmax.f32 %v742, %v606
      %v745 = vmax.f32 %v743, %v612
      %v746 = vmax.f32 %v744, %v618
      %v747 = vmax.f32 %v745, %v624
      %v748 = vmax.f32 %v746, %v630
      %v749 = vmax.f32 %v747, %v636
      %v750 = vmax.f32 %v748, %v642
      %v751 = vmax.f32 %v749, %v648
      %v752 = vmax.f32 %v750, %v654
      %v753 = vmax.f32 %v751, %v660
      %v754 = vmax.f32 %v752, %v666
      %v755 = vmax.f32 %v753, %v672
      %v756 = vmax.f32 %v754, %v678
      %v757 = vmax.f32 %v755, %v684
      %v758 = vmax.f32 %v756, %v690
      %v759 = vmax.f32 %v757, %v758
      %v760 = vrot.slane %v759, 4
      %v761 = vmax.f32 %v759, %v760
      %v762 = vrot.slane %v761, 2
      %v763 = vmax.f32 %v761, %v762
      %v764 = vrot.slane %v763, 1
      %v765 = vmax.f32 %v763, %v764
      %v766 = vsub.f32 %v502, %v728
      %v767 = vsub.f32 %v504, %v765
      %v768 = vsub.f32 %v508, %v728
      %v769 = vsub.f32 %v510, %v765
      %v770 = vsub.f32 %v514, %v728
      %v771 = vsub.f32 %v516, %v765
      %v772 = vsub.f32 %v520, %v728
      %v773 = vsub.f32 %v522, %v765
      %v774 = vsub.f32 %v526, %v728
      %v775 = vsub.f32 %v528, %v765
      %v776 = vsub.f32 %v532, %v728
      %v777 = vsub.f32 %v534, %v765
      %v778 = vsub.f32 %v538, %v728
      %v779 = vsub.f32 %v540, %v765
      %v780 = vsub.f32 %v544, %v728
      %v781 = vsub.f32 %v546, %v765
      %v782 = vsub.f32 %v550, %v728
      %v783 = vsub.f32 %v552, %v765
      %v784 = vsub.f32 %v556, %v728
      %v785 = vsub.f32 %v558, %v765
      %v786 = vsub.f32 %v562, %v728
      %v787 = vsub.f32 %v564, %v765
      %v788 = vsub.f32 %v568, %v728
      %v789 = vsub.f32 %v570, %v765
      %v790 = vsub.f32 %v574, %v728
      %v791 = vsub.f32 %v576, %v765
      %v792 = vsub.f32 %v580, %v728
      %v793 = vsub.f32 %v582, %v765
      %v794 = vsub.f32 %v586, %v728
      %v795 = vsub.f32 %v588, %v765
      %v796 = vsub.f32 %v592, %v728
      %v797 = vsub.f32 %v594, %v765
      %v798 = vsub.f32 %v598, %v728
      %v799 = vsub.f32 %v600, %v765
      %v800 = vsub.f32 %v604, %v728
      %v801 = vsub.f32 %v606, %v765
      %v802 = vsub.f32 %v610, %v728
      %v803 = vsub.f32 %v612, %v765
      %v804 = vsub.f32 %v616, %v728
      %v805 = vsub.f32 %v618, %v765
      %v806 = vsub.f32 %v622, %v728
      %v807 = vsub.f32 %v624, %v765
      %v808 = vsub.f32 %v628, %v728
      %v809 = vsub.f32 %v630, %v765
      %v810 = vsub.f32 %v634, %v728
      %v811 = vsub.f32 %v636, %v765
      %v812 = vsub.f32 %v640, %v728
      %v813 = vsub.f32 %v642, %v765
      %v814 = vsub.f32 %v646, %v728
      %v815 = vsub.f32 %v648, %v765
      %v816 = vsub.f32 %v652, %v728
      %v817 = vsub.f32 %v654, %v765
      %v818 = vsub.f32 %v658, %v728
      %v819 = vsub.f32 %v660, %v765
      %v820 = vsub.f32 %v664, %v728
      %v821 = vsub.f32 %v666, %v765
      %v822 = vsub.f32 %v670, %v728
      %v823 = vsub.f32 %v672, %v765
      %v824 = vsub.f32 %v676, %v728
      %v825 = vsub.f32 %v678, %v765
      %v826 = vsub.f32 %v682, %v728
      %v827 = vsub.f32 %v684, %v765
      %v828 = vsub.f32 %v688, %v728
      %v829 = vsub.f32 %v690, %v765
      %v830 = vmul.f32 %v766, 1.442695
      %v831 = vpow.pop %v830
      %v832 = vmul.f32 %v767, 1.442695
      %v833 = vpow.pop %v832
      %v834 = vmul.f32 %v768, 1.442695
      %v835 = vpow.pop %v834
      %v836 = vmul.f32 %v769, 1.442695
      %v837 = vpow.pop %v836
      %v838 = vmul.f32 %v770, 1.442695
      %v839 = vpow.pop %v838
      %v840 = vmul.f32 %v771, 1.442695
      %v841 = vpow.pop %v840
      %v842 = vmul.f32 %v772, 1.442695
      %v843 = vpow.pop %v842
      %v844 = vmul.f32 %v773, 1.442695
      %v845 = vpow.pop %v844
      %v846 = vmul.f32 %v774, 1.442695
      %v847 = vpow.pop %v846
      %v848 = vmul.f32 %v775, 1.442695
      %v849 = vpow.pop %v848
      %v850 = vmul.f32 %v776, 1.442695
      %v851 = vpow.pop %v850
      %v852 = vmul.f32 %v777, 1.442695
      %v853 = vpow.pop %v852
      %v854 = vmul.f32 %v778, 1.442695
      %v855 = vpow.pop %v854
      %v856 = vmul.f32 %v779, 1.442695
      %v857 = vpow.pop %v856
      %v858 = vmul.f32 %v780, 1.442695
      %v859 = vpow.pop %v858
      %v860 = vmul.f32 %v781, 1.442695
      %v861 = vpow.pop %v860
      %v862 = vmul.f32 %v782, 1.442695
      %v863 = vpow.pop %v862
      %v864 = vmul.f32 %v783, 1.442695
      %v865 = vpow.pop %v864
      %v866 = vmul.f32 %v784, 1.442695
      %v867 = vpow.pop %v866
      %v868 = vmul.f32 %v785, 1.442695
      %v869 = vpow.pop %v868
      %v870 = vmul.f32 %v786, 1.442695
      %v871 = vpow.pop %v870
      %v872 = vmul.f32 %v787, 1.442695
      %v873 = vpow.pop %v872
      %v874 = vmul.f32 %v788, 1.442695
      %v875 = vpow.pop %v874
      %v876 = vmul.f32 %v789, 1.442695
      %v877 = vpow.pop %v876
      %v878 = vmul.f32 %v790, 1.442695
      %v879 = vpow.pop %v878
      %v880 = vmul.f32 %v791, 1.442695
      %v881 = vpow.pop %v880
      %v882 = vmul.f32 %v792, 1.442695
      %v883 = vpow.pop %v882
      %v884 = vmul.f32 %v793, 1.442695
      %v885 = vpow.pop %v884
      %v886 = vmul.f32 %v794, 1.442695
      %v887 = vpow.pop %v886
      %v888 = vmul.f32 %v795, 1.442695
      %v889 = vpow.pop %v888
      %v890 = vmul.f32 %v796, 1.442695
      %v891 = vpow.pop %v890
      %v892 = vmul.f32 %v797, 1.442695
      %v893 = vpow.pop %v892
      %v894 = vmul.f32 %v798, 1.442695
      %v895 = vpow.pop %v894
      %v896 = vmul.f32 %v799, 1.442695
      %v897 = vpow.pop %v896
      %v898 = vmul.f32 %v800, 1.442695
      %v899 = vpow.pop %v898
      %v900 = vmul.f32 %v801, 1.442695
      %v901 = vpow.pop %v900
      %v902 = vmul.f32 %v802, 1.442695
      %v903 = vpow.pop %v902
      %v904 = vmul.f32 %v803, 1.442695
      %v905 = vpow.pop %v904
      %v906 = vmul.f32 %v804, 1.442695
      %v907 = vpow.pop %v906
      %v908 = vmul.f32 %v805, 1.442695
      %v909 = vpow.pop %v908
      %v910 = vmul.f32 %v806, 1.442695
      %v911 = vpow.pop %v910
      %v912 = vmul.f32 %v807, 1.442695
      %v913 = vpow.pop %v912
      %v914 = vmul.f32 %v808, 1.442695
      %v915 = vpow.pop %v914
      %v916 = vmul.f32 %v809, 1.442695
      %v917 = vpow.pop %v916
      %v918 = vmul.f32 %v810, 1.442695
      %v919 = vpow.pop %v918
      %v920 = vmul.f32 %v811, 1.442695
      %v921 = vpow.pop %v920
      %v922 = vmul.f32 %v812, 1.442695
      %v923 = vpow.pop %v922
      %v924 = vmul.f32 %v813, 1.442695
      %v925 = vpow.pop %v924
      %v926 = vmul.f32 %v814, 1.442695
      %v927 = vpow.pop %v926
      %v928 = vmul.f32 %v815, 1.442695
      %v929 = vpow.pop %v928
      %v930 = vmul.f32 %v816, 1.442695
      %v931 = vpow.pop %v930
      %v932 = vmul.f32 %v817, 1.442695
      %v933 = vpow.pop %v932
      %v934 = vmul.f32 %v818, 1.442695
      %v935 = vpow.pop %v934
      %v936 = vmul.f32 %v819, 1.442695
      %v937 = vpow.pop %v936
      %v938 = vmul.f32 %v820, 1.442695
      %v939 = vpow.pop %v938
      %v940 = vmul.f32 %v821, 1.442695
      %v941 = vpow.pop %v940
      %v942 = vmul.f32 %v822, 1.442695
      %v943 = vpow.pop %v942
      %v944 = vmul.f32 %v823, 1.442695
      %v945 = vpow.pop %v944
      %v946 = vmul.f32 %v824, 1.442695
      %v947 = vpow.pop %v946
      %v948 = vmul.f32 %v825, 1.442695
      %v949 = vpow.pop %v948
      %v950 = vmul.f32 %v826, 1.442695
      %v951 = vpow.pop %v950
      %v952 = vmul.f32 %v827, 1.442695
      %v953 = vpow.pop %v952
      %v954 = vmul.f32 %v828, 1.442695
      %v955 = vpow.pop %v954
      %v956 = vmul.f32 %v829, 1.442695
      %v957 = vpow.pop %v956
      %v958 = vsub.f32 -inf, %v728
      %v959 = vsub.f32 -inf, %v765
      %v960 = vmul.f32 %v958, 1.442695
      %v961 = vpow.pop %v960
      %v962 = vmul.f32 %v959, 1.442695
      %v963 = vpow.pop %v962
      %v964 = vmul.f32 %v961, 0.0
      %v965 = vmul.f32 %v963, 0.0
      %v966 = vadd.f32 %v831, %v835
      %v967 = vadd.f32 %v966, %v839
      %v968 = vadd.f32 %v967, %v843
      %v969 = vadd.f32 %v968, %v847
      %v970 = vadd.f32 %v969, %v851
      %v971 = vadd.f32 %v970, %v855
      %v972 = vadd.f32 %v971, %v859
      %v973 = vadd.f32 %v972, %v863
      %v974 = vadd.f32 %v973, %v867
      %v975 = vadd.f32 %v974, %v871
      %v976 = vadd.f32 %v975, %v875
      %v977 = vadd.f32 %v976, %v879
      %v978 = vadd.f32 %v977, %v883
      %v979 = vadd.f32 %v978, %v887
      %v980 = vadd.f32 %v979, %v891
      %v981 = vadd.f32 %v980, %v895
      %v982 = vadd.f32 %v981, %v899
      %v983 = vadd.f32 %v982, %v903
      %v984 = vadd.f32 %v983, %v907
      %v985 = vadd.f32 %v984, %v911
      %v986 = vadd.f32 %v985, %v915
      %v987 = vadd.f32 %v986, %v919
      %v988 = vadd.f32 %v987, %v923
      %v989 = vadd.f32 %v988, %v927
      %v990 = vadd.f32 %v989, %v931
      %v991 = vadd.f32 %v990, %v935
      %v992 = vadd.f32 %v991, %v939
      %v993 = vadd.f32 %v992, %v943
      %v994 = vadd.f32 %v993, %v947
      %v995 = vadd.f32 %v994, %v951
      %v996 = vadd.f32 %v995, %v955
      %v997 = vrot.slane %v996, 4
      %v998 = vadd.f32 %v996, %v997
      %v999 = vrot.slane %v998, 2
      %v1000 = vadd.f32 %v998, %v999
      %v1001 = vrot.slane %v1000, 1
      %v1002 = vadd.f32 %v1000, %v1001
      %v1003 = vadd.f32 %v833, %v837
      %v1004 = vadd.f32 %v1003, %v841
      %v1005 = vadd.f32 %v1004, %v845
      %v1006 = vadd.f32 %v1005, %v849
      %v1007 = vadd.f32 %v1006, %v853
      %v1008 = vadd.f32 %v1007, %v857
      %v1009 = vadd.f32 %v1008, %v861
      %v1010 = vadd.f32 %v1009, %v865
      %v1011 = vadd.f32 %v1010, %v869
      %v1012 = vadd.f32 %v1011, %v873
      %v1013 = vadd.f32 %v1012, %v877
      %v1014 = vadd.f32 %v1013, %v881
      %v1015 = vadd.f32 %v1014, %v885
      %v1016 = vadd.f32 %v1015, %v889
      %v1017 = vadd.f32 %v1016, %v893
      %v1018 = vadd.f32 %v1017, %v897
      %v1019 = vadd.f32 %v1018, %v901
      %v1020 = vadd.f32 %v1019, %v905
      %v1021 = vadd.f32 %v1020, %v909
      %v1022 = vadd.f32 %v1021, %v913
      %v1023 = vadd.f32 %v1022, %v917
      %v1024 = vadd.f32 %v1023, %v921
      %v1025 = vadd.f32 %v1024, %v925
      %v1026 = vadd.f32 %v1025, %v929
      %v1027 = vadd.f32 %v1026, %v933
      %v1028 = vadd.f32 %v1027, %v937
      %v1029 = vadd.f32 %v1028, %v941
      %v1030 = vadd.f32 %v1029, %v945
      %v1031 = vadd.f32 %v1030, %v949
      %v1032 = vadd.f32 %v1031, %v953
      %v1033 = vadd.f32 %v1032, %v957
      %v1034 = vrot.slane %v1033, 4
      %v1035 = vadd.f32 %v1033, %v1034
      %v1036 = vrot.slane %v1035, 2
      %v1037 = vadd.f32 %v1035, %v1036
      %v1038 = vrot.slane %v1037, 1
      %v1039 = vadd.f32 %v1037, %v1038
      %v1040 = vadd.f32 %v964, %v1002
      %v1041 = vadd.f32 %v965, %v1039
      %v1043 = vcombine.high %v263, %v263
      %v1045 = vpack.c.bf16 %v263, %v263
      %v1046 = vpack.c.bf16 %v1043, %v1043
      %v1047 = vpack.c.bf16 %v835, %v831
      %v1048 = vpack.c.bf16 %v837, %v833
      %v1049 = vpack.c.bf16 %v843, %v839
      %v1050 = vpack.c.bf16 %v845, %v841
      %v1051 = vpack.c.bf16 %v851, %v847
      %v1052 = vpack.c.bf16 %v853, %v849
      %v1053 = vpack.c.bf16 %v859, %v855
      %v1054 = vpack.c.bf16 %v861, %v857
      %v1055 = vpack.c.bf16 %v867, %v863
      %v1056 = vpack.c.bf16 %v869, %v865
      %v1057 = vpack.c.bf16 %v875, %v871
      %v1058 = vpack.c.bf16 %v877, %v873
      %v1059 = vpack.c.bf16 %v883, %v879
      %v1060 = vpack.c.bf16 %v885, %v881
      %v1061 = vpack.c.bf16 %v891, %v887
      %v1062 = vpack.c.bf16 %v893, %v889
      %v1063 = vpack.c.bf16 %v899, %v895
      %v1064 = vpack.c.bf16 %v901, %v897
      %v1065 = vpack.c.bf16 %v907, %v903
      %v1066 = vpack.c.bf16 %v909, %v905
      %v1067 = vpack.c.bf16 %v915, %v911
      %v1068 = vpack.c.bf16 %v917, %v913
      %v1069 = vpack.c.bf16 %v923, %v919
      %v1070 = vpack.c.bf16 %v925, %v921
      %v1071 = vpack.c.bf16 %v931, %v927
      %v1072 = vpack.c.bf16 %v933, %v929
      %v1073 = vpack.c.bf16 %v939, %v935
      %v1074 = vpack.c.bf16 %v941, %v937
      %v1075 = vpack.c.bf16 %v947, %v943
      %v1076 = vpack.c.bf16 %v949, %v945
      %v1077 = vpack.c.bf16 %v955, %v951
      %v1078 = vpack.c.bf16 %v957, %v953
      %1079 = vmatprep.subr.bf16.mxu0 %v1048
      %1080 = vmatpush1.bf16.msra.mxu0 %v1047
      %1081 = vmatprep.subr.bf16.mxu0 %v1050
      %1082 = vmatpush1.bf16.msra.mxu0 %v1049
      %1083 = vmatprep.subr.bf16.mxu0 %v1052
      %1084 = vmatpush1.bf16.msra.mxu0 %v1051
      %1085 = vmatprep.subr.bf16.mxu0 %v1054
      %1086 = vmatpush1.bf16.msra.mxu0 %v1053
      %1087 = vmatprep.subr.bf16.mxu0 %v1056
      %1088 = vmatpush1.bf16.msra.mxu0 %v1055
      %1089 = vmatprep.subr.bf16.mxu0 %v1058
      %1090 = vmatpush1.bf16.msra.mxu0 %v1057
      %1091 = vmatprep.subr.bf16.mxu0 %v1060
      %1092 = vmatpush1.bf16.msra.mxu0 %v1059
      %1093 = vmatprep.subr.bf16.mxu0 %v1062
      %1094 = vmatpush1.bf16.msra.mxu0 %v1061
      %1095 = vmatprep.subr.bf16.mxu0 %v1064
      %1096 = vmatpush1.bf16.msra.mxu0 %v1063
      %1097 = vmatprep.subr.bf16.mxu0 %v1066
      %1098 = vmatpush1.bf16.msra.mxu0 %v1065
      %1099 = vmatprep.subr.bf16.mxu0 %v1068
      %1100 = vmatpush1.bf16.msra.mxu0 %v1067
      %1101 = vmatprep.subr.bf16.mxu0 %v1070
      %1102 = vmatpush1.bf16.msra.mxu0 %v1069
      %1103 = vmatprep.subr.bf16.mxu0 %v1072
      %1104 = vmatpush1.bf16.msra.mxu0 %v1071
      %1105 = vmatprep.subr.bf16.mxu0 %v1074
      %1106 = vmatpush1.bf16.msra.mxu0 %v1073
      %1107 = vmatprep.subr.bf16.mxu0 %v1076
      %1108 = vmatpush1.bf16.msra.mxu0 %v1075
      %1109 = vmatprep.subr.bf16.mxu0 %v1078
      %1110 = vmatpush1.bf16.msra.mxu0 %v1077
      %1111 = vmatprep.mubr.bf16.mxu0 %v1046
      %1112 = vmatmul.mubr.bf16.gmra.mrb[0].mxu0 %v1045
      %v1113 = vpop.f32.mrb[0].mxu0
      %v1114 = vadd.f32 0.0, %v1113
      %v1115 = vpop.f32.mrb[0].mxu0
      %v1116 = vadd.f32 0.0, %v1115
      %v1117 = vpop.f32.mrb[0].mxu0
      %v1118 = vpop.f32.mrb[0].mxu0
      %1119 = vdwg.mxu0
      %v1120 = vadd.f32 %v964, %v1114
      %v1121 = vadd.f32 %v965, %v1116
      %v1122 = vrcp.pop %v1040
      %v1123 = vrcp.pop %v1041
      %v1124 = vmul.f32 %v1120, %v1122
      %v1125 = vmul.f32 %v1121, %v1123
      %1126 = vset.pattern.permute.xlu0 6
      %1127 = vperm.xlu0 %1126, %v188
      %v1128 = vpop.permute.xlu0 %1127
      %v1130 = vmul.f32 %v1124, %v1128
      %v1131 = vmul.f32 %v1125, %v1128
      %1132 = vset.pattern.permute.xlu0 7
      %1133 = vperm.xlu0 %1132, %v188
      %v1134 = vpop.permute.xlu0 %1133
      %v1136 = vadd.f32 %v1130, %v1134
      %v1137 = vadd.f32 %v1131, %v1134
      %1139 = vset.pattern.permute.xlu0 0
      %1140 = vperm.xlu0 %1139, %v190
      %v1141 = vpop.permute.xlu0 %1140
      %v1143 = vunpack.c.l.s4 839922192
      %v1144 = vunpack.c.0.s8 %v1143
      %v1145 = vlaneseq
      %v1146 = vshrl.u32 %v1145, 7
      %v1147 = vsub.s32 %v1144, %v1146
      %v1148 = vrot.slane %v1141, %v1147
      %v1150 = vmul.f32 %v189, %v1148
      %v1153 = vcombine.low %v1136, %v1137
      %v1155 = vadd.f32 %v1150, %v1153
      %v1156 = vadd.f32 %v1155, %v189
      %1157 = vst [vmem:[%s187] sm:$0xff] %v1156
      %p1158 = scmp.lt.s32.totalorder %s14, 1
      %s1159 = scalar_select %p1158, %s14, 1
      %s1160 = smul.addr %s1159, 2
      %s1161 = smul.addr %s1160, 4
      %s1162 = scalar_lea.vmem %s3, %s1161
      // Predicated region
      $region33: #{bndc_forward.3} parent=31 // pred_check
        %p1163 = pneg %p105
      $region34: #{bndc_forward.3} parent=31 // pred_check_branch
        %1165 = sbr.rel (%p1163) target = $region36
      $region35: #{bndc_forward.3} parent=31 // pred_region
        _
      $region36: #{bndc_forward.3} parent=31 // pred_fallthru
        _
    $region32: #{bndc_forward.3} parent=5 // pred_fallthru
      _
    %p1166 = scmp.le.s32.totalorder 2, %s9
    // Predicated region
    $region37: #{bndc_forward.3} parent=5 // pred_check
      %p1167 = pneg %p1166
    $region38: #{bndc_forward.3} parent=5 // pred_check_branch
      %1169 = sbr.rel (%p1167) target = $region40
    $region39: #{bndc_forward.3} parent=5 // pred_region
      %s1170 = ssub.s32 %s9, 2
      // Predicated region
      $region41: #{bndc_forward.3} parent=39 // pred_check
        %p1171 = pneg %p111
      $region42: #{bndc_forward.3} parent=39 // pred_check_branch
        %1173 = sbr.rel (%p1171) target = $region44
      $region43: #{bndc_forward.3} parent=39 // pred_region
        %p1174 = scmp.lt.s32.totalorder %s15, 1
        %s1175 = scalar_select %p1174, %s15, 1
        %s1176 = smul.addr %s1175, 2
        %s1177 = smul.addr %s1176, 4
        %s1178 = scalar_lea.vmem %s3, %s1177
      $region44: #{bndc_forward.3} parent=39 // pred_fallthru
        _
    $region40: #{bndc_forward.3} parent=5 // pred_fallthru
      _
  $region6: #{bndc_forward.3} parent=0 // loop_footer
    %s13 = sadd.s32 1, %s9
  $region7: #{bndc_forward.3} parent=0 // loop_footer_branch
    %8 = sbr.rel target = $region3
  $region8: #{bndc_forward.3} parent=0 // loop_exit
    _

</llo_original>
